<compile_context>
chip_gen: v7x
topology: tpu7x:2x2x1
jax: 0.10.0
libtpu: 0.0.40
codegen_flags: <defaults>
</compile_context>

<pallas_src>
import jax
import jax.numpy as jnp
from jax.experimental import pallas as pl
from jax.experimental.pallas import tpu as pltpu


def _round_up(x, m):
    return (x + m - 1) // m * m


# ----------------------------------------------------------------------------
# Fused Pallas kernel: n_layers LSTM + fc1 -> relu -> fc2 head
# ----------------------------------------------------------------------------
def _make_fused_lstmnet_kernel(n_layers, T, Bp, H):
    def kernel(*refs):
        idx = 0
        x_ref = refs[idx]; idx += 1          # (T*Bp, D)  time-major, flattened
        h0_ref = refs[idx]; idx += 1         # (L, Bp, H)
        c0_ref = refs[idx]; idx += 1         # (L, Bp, H)
        layer_refs = []
        for _ in range(n_layers):            # per layer: W_ih (in,4H), W_hh (H,4H), b (1,4H)
            layer_refs.append((refs[idx], refs[idx + 1], refs[idx + 2]))
            idx += 3
        w1_ref, b1_ref, w2_ref, b2_ref = refs[idx:idx + 4]; idx += 4
        out_ref, hn_ref, cn_ref = refs[idx:idx + 3]; idx += 3
        gx_ref, seq_ref = refs[idx:idx + 2]  # VMEM scratch: (T*Bp, 4H), (T*Bp, H)

        h_top = None
        for l in range(n_layers):
            wih_ref, whh_ref, b_ref = layer_refs[l]
            whh = whh_ref[...]               # (H, 4H), loaded once per layer

            # Hoisted input projection for ALL timesteps: one large matmul with
            # M = T*Bp, outside the serial dependency chain.
            inp = x_ref[...] if l == 0 else seq_ref[...]
            gx_ref[...] = (jnp.dot(inp, wih_ref[...],
                                   preferred_element_type=jnp.float32)
                           + b_ref[...])

            write_seq = l < n_layers - 1     # top layer's sequence output is dead

            def step(t, carry):
                h, c = carry
                off = pl.multiple_of(t * Bp, Bp)   # Bp % 8 == 0 -> tile-aligned
                gates = gx_ref[pl.ds(off, Bp), :] + jnp.dot(
                    h, whh, preferred_element_type=jnp.float32)    # (Bp, 4H)
                # Full-vreg nonlinearities, slice afterwards. Gate order: i,f,g,o.
                sig = jax.nn.sigmoid(gates)
                tnh = jnp.tanh(gates)
                i_g = sig[:, 0:H]
                f_g = sig[:, H:2 * H]
                g_g = tnh[:, 2 * H:3 * H]
                o_g = sig[:, 3 * H:4 * H]
                c_new = f_g * c + i_g * g_g
                h_new = o_g * jnp.tanh(c_new)
                if write_seq:
                    seq_ref[pl.ds(off, Bp), :] = h_new
                return (h_new, c_new)

            h_fin, c_fin = jax.lax.fori_loop(
                0, T, step, (h0_ref[l], c0_ref[l]), unroll=True)
            hn_ref[l] = h_fin
            cn_ref[l] = c_fin
            h_top = h_fin

        # fc1 -> relu -> fc2 on the last timestep of the top layer
        # (fc1 over the full sequence followed by [:, -1] is mathematically identical).
        z = (jnp.dot(h_top, w1_ref[...], preferred_element_type=jnp.float32)
             + b1_ref[...])
        z = jnp.maximum(z, 0.0)
        out_ref[...] = (jnp.dot(z, w2_ref[...], preferred_element_type=jnp.float32)
                        + b2_ref[...])

    return kernel


# ----------------------------------------------------------------------------
# Wrapper
# ----------------------------------------------------------------------------
@jax.jit
def lstmnet_forward(x, h0, c0, params):
    """x: (B, T, D); h0, c0: (n_layers, B, H). Returns (out (B, O), (h_n, c_n))."""
    B, T, D = x.shape
    L, _, H = h0.shape
    O = params["w2"].shape[-1]

    # Pad batch to a full 8-sublane tile: aligned pl.ds slices in the kernel and
    # better MXU-M / sublane utilization. Padded rows are discarded at the end.
    Bp = _round_up(B, 8)
    if Bp != B:
        x = jnp.pad(x, ((0, Bp - B), (0, 0), (0, 0)))
        h0 = jnp.pad(h0, ((0, 0), (0, Bp - B), (0, 0)))
        c0 = jnp.pad(c0, ((0, 0), (0, Bp - B), (0, 0)))

    # Time-major and flattened over (T, Bp): the per-layer input projection is a
    # single matmul with M = T*Bp.
    x_flat = jnp.transpose(x, (1, 0, 2)).reshape(T * Bp, D)

    lstm_flat = []
    for w_ih, w_hh, b in params["lstm"]:
        lstm_flat += [w_ih, w_hh, b]

    kernel = _make_fused_lstmnet_kernel(L, T, Bp, H)
    out, hn, cn = pl.pallas_call(
        kernel,
        out_shape=(jax.ShapeDtypeStruct((Bp, O), jnp.float32),
                   jax.ShapeDtypeStruct((L, Bp, H), jnp.float32),
                   jax.ShapeDtypeStruct((L, Bp, H), jnp.float32)),
        scratch_shapes=[pltpu.VMEM((T * Bp, 4 * H), jnp.float32),   # gates_x
                        pltpu.VMEM((T * Bp, H), jnp.float32)],      # inter-layer seq
        compiler_params=pltpu.CompilerParams(vmem_limit_bytes=32 * 1024 * 1024),
    )(x_flat, h0, c0, *lstm_flat,
      params["w1"], params["b1"], params["w2"], params["b2"])

    return out[:B], (hn[:, :B], cn[:, :B])


# ----------------------------------------------------------------------------
# Pure-JAX reference (for correctness check)
# ----------------------------------------------------------------------------
def lstmnet_reference(x, h0, c0, params):
    layer_in = x
    hs, cs = [], []
    for l, (w_ih, w_hh, b) in enumerate(params["lstm"]):
        H = h0.shape[-1]

        def step(carry, x_t):
            h, c = carry
            gates = x_t @ w_ih + h @ w_hh + b[0]
            i_g = jax.nn.sigmoid(gates[:, 0:H])
            f_g = jax.nn.sigmoid(gates[:, H:2 * H])
            g_g = jnp.tanh(gates[:, 2 * H:3 * H])
            o_g = jax.nn.sigmoid(gates[:, 3 * H:4 * H])
            c = f_g * c + i_g * g_g
            h = o_g * jnp.tanh(c)
            return (h, c), h

        (h_n, c_n), out_tm = jax.lax.scan(step, (h0[l], c0[l]),
                                          jnp.transpose(layer_in, (1, 0, 2)))
        layer_in = jnp.transpose(out_tm, (1, 0, 2))
        hs.append(h_n)
        cs.append(c_n)
    z = jnp.maximum(layer_in[:, -1] @ params["w1"] + params["b1"][0], 0.0)
    out = z @ params["w2"] + params["b2"][0]
    return out, (jnp.stack(hs, 0), jnp.stack(cs, 0))


# ----------------------------------------------------------------------------
# Deterministic parameter init (mirrors nn.LSTM / nn.Linear shapes;
# W stored transposed vs. PyTorch, biases pre-summed)
# ----------------------------------------------------------------------------
def init_params(key, input_dim, hidden_dim, hidden_dim_fc1, output_dim, n_layers):
    params = {"lstm": []}
    k = 1.0 / jnp.sqrt(hidden_dim)
    for l in range(n_layers):
        in_d = input_dim if l == 0 else hidden_dim
        key, k1, k2, k3, k4 = jax.random.split(key, 5)
        w_ih = jax.random.uniform(k1, (in_d, 4 * hidden_dim), jnp.float32, -k, k)
        w_hh = jax.random.uniform(k2, (hidden_dim, 4 * hidden_dim), jnp.float32, -k, k)
        b_ih = jax.random.uniform(k3, (4 * hidden_dim,), jnp.float32, -k, k)
        b_hh = jax.random.uniform(k4, (4 * hidden_dim,), jnp.float32, -k, k)
        params["lstm"].append((w_ih, w_hh, (b_ih + b_hh)[None, :]))
    key, k1, k2, k3, k4 = jax.random.split(key, 5)
    kf1 = 1.0 / jnp.sqrt(hidden_dim)
    kf2 = 1.0 / jnp.sqrt(hidden_dim_fc1)
    params["w1"] = jax.random.uniform(k1, (hidden_dim, hidden_dim_fc1), jnp.float32, -kf1, kf1)
    params["b1"] = jax.random.uniform(k2, (hidden_dim_fc1,), jnp.float32, -kf1, kf1)[None, :]
    params["w2"] = jax.random.uniform(k3, (hidden_dim_fc1, output_dim), jnp.float32, -kf2, kf2)
    params["b2"] = jax.random.uniform(k4, (output_dim,), jnp.float32, -kf2, kf2)[None, :]
    return params


# ----------------------------------------------------------------------------
if __name__ == "__main__":
    B, T = 2, 8
    input_dim, hidden_dim_, hidden_dim_fc1, output_dim, n_layers = 16, 32, 32, 8, 2

    key = jax.random.PRNGKey(0)
    key, kx = jax.random.split(key)
    x = jax.random.normal(kx, (B, T, input_dim), jnp.float32)
    # init_hidden(batch_size): zeros of shape (n_layers, B, H)
    h0 = jnp.zeros((n_layers, B, hidden_dim_), jnp.float32)
    c0 = jnp.zeros((n_layers, B, hidden_dim_), jnp.float32)

    params = init_params(key, input_dim, hidden_dim_, hidden_dim_fc1, output_dim, n_layers)

    out, (h_n, c_n) = lstmnet_forward(x, h0, c0, params)
    jax.block_until_ready((out, h_n, c_n))

    ref_out, (ref_h, ref_c) = lstmnet_reference(x, h0, c0, params)
    assert out.shape == (B, output_dim)
    assert h_n.shape == (n_layers, B, hidden_dim_)
    assert c_n.shape == (n_layers, B, hidden_dim_)
    assert jnp.allclose(out, ref_out, atol=1e-4, rtol=1e-4)
    assert jnp.allclose(h_n, ref_h, atol=1e-4, rtol=1e-4)
    assert jnp.allclose(c_n, ref_c, atol=1e-4, rtol=1e-4)

    print("KERNEL_OK")
</pallas_src>

<mosaic_0001>
module attributes {stable_mosaic.version = 11 : i64} {
  func.func @kernel(%arg0: memref<64x16xf32, #tpu.memory_space<vmem>>, %arg1: memref<2x8x32xf32, #tpu.memory_space<vmem>>, %arg2: memref<2x8x32xf32, #tpu.memory_space<vmem>>, %arg3: memref<16x128xf32, #tpu.memory_space<vmem>>, %arg4: memref<32x128xf32, #tpu.memory_space<vmem>>, %arg5: memref<1x128xf32, #tpu.memory_space<vmem>>, %arg6: memref<32x128xf32, #tpu.memory_space<vmem>>, %arg7: memref<32x128xf32, #tpu.memory_space<vmem>>, %arg8: memref<1x128xf32, #tpu.memory_space<vmem>>, %arg9: memref<32x32xf32, #tpu.memory_space<vmem>>, %arg10: memref<1x32xf32, #tpu.memory_space<vmem>>, %arg11: memref<32x8xf32, #tpu.memory_space<vmem>>, %arg12: memref<1x8xf32, #tpu.memory_space<vmem>>, %arg13: memref<8x8xf32, #tpu.memory_space<vmem>>, %arg14: memref<2x8x32xf32, #tpu.memory_space<vmem>>, %arg15: memref<2x8x32xf32, #tpu.memory_space<vmem>>, %arg16: memref<64x128xf32, #tpu.memory_space<vmem>>, %arg17: memref<64x32xf32, #tpu.memory_space<vmem>>) attributes {dimension_semantics = [], scalar_prefetch = 0 : i64, scratch_operands = 2 : i64, tpu.core_type = #tpu.core_type<tc>} {
    %c0 = arith.constant 0 : index
    %c0_0 = arith.constant 0 : index
    %0 = vector.load %arg4[%c0, %c0_0] : memref<32x128xf32, #tpu.memory_space<vmem>>, vector<32x128xf32>
    %c0_1 = arith.constant 0 : index
    %c0_2 = arith.constant 0 : index
    %1 = vector.load %arg0[%c0_1, %c0_2] : memref<64x16xf32, #tpu.memory_space<vmem>>, vector<64x16xf32>
    %c0_3 = arith.constant 0 : index
    %c0_4 = arith.constant 0 : index
    %2 = vector.load %arg3[%c0_3, %c0_4] : memref<16x128xf32, #tpu.memory_space<vmem>>, vector<16x128xf32>
    %cst = arith.constant dense<0.000000e+00> : vector<64x128xf32>
    %3 = tpu.matmul %1, %2, %cst {dimension_numbers = #tpu.dot_dimension_numbers<[1], [0], [0], [1], [0, 0, 1, 1], [], []>} : vector<64x16xf32>, vector<16x128xf32>, vector<64x128xf32> -> vector<64x128xf32>
    %c0_5 = arith.constant 0 : index
    %c0_6 = arith.constant 0 : index
    %4 = vector.load %arg5[%c0_5, %c0_6] : memref<1x128xf32, #tpu.memory_space<vmem>>, vector<1x128xf32>
    %5 = vector.broadcast %4 : vector<1x128xf32> to vector<64x128xf32>
    %6 = arith.addf %3, %5 : vector<64x128xf32>
    %c0_7 = arith.constant 0 : index
    %c0_8 = arith.constant 0 : index
    %7 = vector.load %arg16[%c0_7, %c0_8] : memref<64x128xf32, #tpu.memory_space<vmem>>, vector<64x128xf32>
    tpu.vector_store %arg16[%c0_7, %c0_8], %6 {strides = array<i32>} : memref<64x128xf32, #tpu.memory_space<vmem>>, vector<64x128xf32>,
    %c0_9 = arith.constant 0 : index
    %c0_10 = arith.constant 0 : index
    %c0_11 = arith.constant 0 : index
    %8 = vector.load %arg1[%c0_9, %c0_10, %c0_11] : memref<2x8x32xf32, #tpu.memory_space<vmem>>, vector<1x8x32xf32>
    %9 = vector.shape_cast %8 : vector<1x8x32xf32> to vector<8x32xf32>
    %c0_12 = arith.constant 0 : index
    %c0_13 = arith.constant 0 : index
    %c0_14 = arith.constant 0 : index
    %10 = vector.load %arg2[%c0_12, %c0_13, %c0_14] : memref<2x8x32xf32, #tpu.memory_space<vmem>>, vector<1x8x32xf32>
    %11 = vector.shape_cast %10 : vector<1x8x32xf32> to vector<8x32xf32>
    %c0_i32 = arith.constant 0 : i32
    %c8_i32 = arith.constant 8 : i32
    %12 = arith.muli %c0_i32, %c8_i32 : i32
    %13 = tpu.assume_multiple %12, 8 : i32
    %14 = arith.index_cast %13 : i32 to index
    %c0_15 = arith.constant 0 : index
    %15 = vector.load %arg16[%14, %c0_15] : memref<64x128xf32, #tpu.memory_space<vmem>>, vector<8x128xf32>
    %cst_16 = arith.constant dense<0.000000e+00> : vector<8x128xf32>
    %16 = tpu.matmul %9, %0, %cst_16 {dimension_numbers = #tpu.dot_dimension_numbers<[1], [0], [0], [1], [0, 0, 1, 1], [], []>} : vector<8x32xf32>, vector<32x128xf32>, vector<8x128xf32> -> vector<8x128xf32>
    %17 = arith.addf %15, %16 : vector<8x128xf32>
    %18 = arith.negf %17 : vector<8x128xf32>
    %19 = math.exp %18 : vector<8x128xf32>
    %cst_17 = arith.constant 1.000000e+00 : f32
    %20 = vector.broadcast %cst_17 : f32 to vector<8x128xf32>
    %21 = arith.addf %20, %19 : vector<8x128xf32>
    %22 = arith.divf %20, %21 : vector<8x128xf32>
    %23 = math.tanh %17 : vector<8x128xf32>
    %24 = vector.extract_strided_slice %22 {offsets = [0, 0], sizes = [8, 32], strides = [1, 1]} : vector<8x128xf32> to vector<8x32xf32>
    %25 = vector.extract_strided_slice %22 {offsets = [0, 32], sizes = [8, 32], strides = [1, 1]} : vector<8x128xf32> to vector<8x32xf32>
    %26 = vector.extract_strided_slice %23 {offsets = [0, 64], sizes = [8, 32], strides = [1, 1]} : vector<8x128xf32> to vector<8x32xf32>
    %27 = vector.extract_strided_slice %22 {offsets = [0, 96], sizes = [8, 32], strides = [1, 1]} : vector<8x128xf32> to vector<8x32xf32>
    %28 = arith.mulf %25, %11 : vector<8x32xf32>
    %29 = arith.mulf %24, %26 : vector<8x32xf32>
    %30 = arith.addf %28, %29 : vector<8x32xf32>
    %31 = math.tanh %30 : vector<8x32xf32>
    %32 = arith.mulf %27, %31 : vector<8x32xf32>
    %33 = arith.index_cast %13 : i32 to index
    %c0_18 = arith.constant 0 : index
    %34 = vector.load %arg17[%33, %c0_18] : memref<64x32xf32, #tpu.memory_space<vmem>>, vector<8x32xf32>
    tpu.vector_store %arg17[%33, %c0_18], %32 {strides = array<i32>} : memref<64x32xf32, #tpu.memory_space<vmem>>, vector<8x32xf32>,
    %c1_i32 = arith.constant 1 : i32
    %c8_i32_19 = arith.constant 8 : i32
    %35 = arith.muli %c1_i32, %c8_i32_19 : i32
    %36 = tpu.assume_multiple %35, 8 : i32
    %37 = arith.index_cast %36 : i32 to index
    %c0_20 = arith.constant 0 : index
    %38 = vector.load %arg16[%37, %c0_20] : memref<64x128xf32, #tpu.memory_space<vmem>>, vector<8x128xf32>
    %cst_21 = arith.constant dense<0.000000e+00> : vector<8x128xf32>
    %39 = tpu.matmul %32, %0, %cst_21 {dimension_numbers = #tpu.dot_dimension_numbers<[1], [0], [0], [1], [0, 0, 1, 1], [], []>} : vector<8x32xf32>, vector<32x128xf32>, vector<8x128xf32> -> vector<8x128xf32>
    %40 = arith.addf %38, %39 : vector<8x128xf32>
    %41 = arith.negf %40 : vector<8x128xf32>
    %42 = math.exp %41 : vector<8x128xf32>
    %cst_22 = arith.constant 1.000000e+00 : f32
    %43 = vector.broadcast %cst_22 : f32 to vector<8x128xf32>
    %44 = arith.addf %43, %42 : vector<8x128xf32>
    %45 = arith.divf %43, %44 : vector<8x128xf32>
    %46 = math.tanh %40 : vector<8x128xf32>
    %47 = vector.extract_strided_slice %45 {offsets = [0, 0], sizes = [8, 32], strides = [1, 1]} : vector<8x128xf32> to vector<8x32xf32>
    %48 = vector.extract_strided_slice %45 {offsets = [0, 32], sizes = [8, 32], strides = [1, 1]} : vector<8x128xf32> to vector<8x32xf32>
    %49 = vector.extract_strided_slice %46 {offsets = [0, 64], sizes = [8, 32], strides = [1, 1]} : vector<8x128xf32> to vector<8x32xf32>
    %50 = vector.extract_strided_slice %45 {offsets = [0, 96], sizes = [8, 32], strides = [1, 1]} : vector<8x128xf32> to vector<8x32xf32>
    %51 = arith.mulf %48, %30 : vector<8x32xf32>
    %52 = arith.mulf %47, %49 : vector<8x32xf32>
    %53 = arith.addf %51, %52 : vector<8x32xf32>
    %54 = math.tanh %53 : vector<8x32xf32>
    %55 = arith.mulf %50, %54 : vector<8x32xf32>
    %56 = arith.index_cast %36 : i32 to index
    %c0_23 = arith.constant 0 : index
    %57 = vector.load %arg17[%56, %c0_23] : memref<64x32xf32, #tpu.memory_space<vmem>>, vector<8x32xf32>
    tpu.vector_store %arg17[%56, %c0_23], %55 {strides = array<i32>} : memref<64x32xf32, #tpu.memory_space<vmem>>, vector<8x32xf32>,
    %c2_i32 = arith.constant 2 : i32
    %c8_i32_24 = arith.constant 8 : i32
    %58 = arith.muli %c2_i32, %c8_i32_24 : i32
    %59 = tpu.assume_multiple %58, 8 : i32
    %60 = arith.index_cast %59 : i32 to index
    %c0_25 = arith.constant 0 : index
    %61 = vector.load %arg16[%60, %c0_25] : memref<64x128xf32, #tpu.memory_space<vmem>>, vector<8x128xf32>
    %cst_26 = arith.constant dense<0.000000e+00> : vector<8x128xf32>
    %62 = tpu.matmul %55, %0, %cst_26 {dimension_numbers = #tpu.dot_dimension_numbers<[1], [0], [0], [1], [0, 0, 1, 1], [], []>} : vector<8x32xf32>, vector<32x128xf32>, vector<8x128xf32> -> vector<8x128xf32>
    %63 = arith.addf %61, %62 : vector<8x128xf32>
    %64 = arith.negf %63 : vector<8x128xf32>
    %65 = math.exp %64 : vector<8x128xf32>
    %cst_27 = arith.constant 1.000000e+00 : f32
    %66 = vector.broadcast %cst_27 : f32 to vector<8x128xf32>
    %67 = arith.addf %66, %65 : vector<8x128xf32>
    %68 = arith.divf %66, %67 : vector<8x128xf32>
    %69 = math.tanh %63 : vector<8x128xf32>
    %70 = vector.extract_strided_slice %68 {offsets = [0, 0], sizes = [8, 32], strides = [1, 1]} : vector<8x128xf32> to vector<8x32xf32>
    %71 = vector.extract_strided_slice %68 {offsets = [0, 32], sizes = [8, 32], strides = [1, 1]} : vector<8x128xf32> to vector<8x32xf32>
    %72 = vector.extract_strided_slice %69 {offsets = [0, 64], sizes = [8, 32], strides = [1, 1]} : vector<8x128xf32> to vector<8x32xf32>
    %73 = vector.extract_strided_slice %68 {offsets = [0, 96], sizes = [8, 32], strides = [1, 1]} : vector<8x128xf32> to vector<8x32xf32>
    %74 = arith.mulf %71, %53 : vector<8x32xf32>
    %75 = arith.mulf %70, %72 : vector<8x32xf32>
    %76 = arith.addf %74, %75 : vector<8x32xf32>
    %77 = math.tanh %76 : vector<8x32xf32>
    %78 = arith.mulf %73, %77 : vector<8x32xf32>
    %79 = arith.index_cast %59 : i32 to index
    %c0_28 = arith.constant 0 : index
    %80 = vector.load %arg17[%79, %c0_28] : memref<64x32xf32, #tpu.memory_space<vmem>>, vector<8x32xf32>
    tpu.vector_store %arg17[%79, %c0_28], %78 {strides = array<i32>} : memref<64x32xf32, #tpu.memory_space<vmem>>, vector<8x32xf32>,
    %c3_i32 = arith.constant 3 : i32
    %c8_i32_29 = arith.constant 8 : i32
    %81 = arith.muli %c3_i32, %c8_i32_29 : i32
    %82 = tpu.assume_multiple %81, 8 : i32
    %83 = arith.index_cast %82 : i32 to index
    %c0_30 = arith.constant 0 : index
    %84 = vector.load %arg16[%83, %c0_30] : memref<64x128xf32, #tpu.memory_space<vmem>>, vector<8x128xf32>
    %cst_31 = arith.constant dense<0.000000e+00> : vector<8x128xf32>
    %85 = tpu.matmul %78, %0, %cst_31 {dimension_numbers = #tpu.dot_dimension_numbers<[1], [0], [0], [1], [0, 0, 1, 1], [], []>} : vector<8x32xf32>, vector<32x128xf32>, vector<8x128xf32> -> vector<8x128xf32>
    %86 = arith.addf %84, %85 : vector<8x128xf32>
    %87 = arith.negf %86 : vector<8x128xf32>
    %88 = math.exp %87 : vector<8x128xf32>
    %cst_32 = arith.constant 1.000000e+00 : f32
    %89 = vector.broadcast %cst_32 : f32 to vector<8x128xf32>
    %90 = arith.addf %89, %88 : vector<8x128xf32>
    %91 = arith.divf %89, %90 : vector<8x128xf32>
    %92 = math.tanh %86 : vector<8x128xf32>
    %93 = vector.extract_strided_slice %91 {offsets = [0, 0], sizes = [8, 32], strides = [1, 1]} : vector<8x128xf32> to vector<8x32xf32>
    %94 = vector.extract_strided_slice %91 {offsets = [0, 32], sizes = [8, 32], strides = [1, 1]} : vector<8x128xf32> to vector<8x32xf32>
    %95 = vector.extract_strided_slice %92 {offsets = [0, 64], sizes = [8, 32], strides = [1, 1]} : vector<8x128xf32> to vector<8x32xf32>
    %96 = vector.extract_strided_slice %91 {offsets = [0, 96], sizes = [8, 32], strides = [1, 1]} : vector<8x128xf32> to vector<8x32xf32>
    %97 = arith.mulf %94, %76 : vector<8x32xf32>
    %98 = arith.mulf %93, %95 : vector<8x32xf32>
    %99 = arith.addf %97, %98 : vector<8x32xf32>
    %100 = math.tanh %99 : vector<8x32xf32>
    %101 = arith.mulf %96, %100 : vector<8x32xf32>
    %102 = arith.index_cast %82 : i32 to index
    %c0_33 = arith.constant 0 : index
    %103 = vector.load %arg17[%102, %c0_33] : memref<64x32xf32, #tpu.memory_space<vmem>>, vector<8x32xf32>
    tpu.vector_store %arg17[%102, %c0_33], %101 {strides = array<i32>} : memref<64x32xf32, #tpu.memory_space<vmem>>, vector<8x32xf32>,
    %c4_i32 = arith.constant 4 : i32
    %c8_i32_34 = arith.constant 8 : i32
    %104 = arith.muli %c4_i32, %c8_i32_34 : i32
    %105 = tpu.assume_multiple %104, 8 : i32
    %106 = arith.index_cast %105 : i32 to index
    %c0_35 = arith.constant 0 : index
    %107 = vector.load %arg16[%106, %c0_35] : memref<64x128xf32, #tpu.memory_space<vmem>>, vector<8x128xf32>
    %cst_36 = arith.constant dense<0.000000e+00> : vector<8x128xf32>
    %108 = tpu.matmul %101, %0, %cst_36 {dimension_numbers = #tpu.dot_dimension_numbers<[1], [0], [0], [1], [0, 0, 1, 1], [], []>} : vector<8x32xf32>, vector<32x128xf32>, vector<8x128xf32> -> vector<8x128xf32>
    %109 = arith.addf %107, %108 : vector<8x128xf32>
    %110 = arith.negf %109 : vector<8x128xf32>
    %111 = math.exp %110 : vector<8x128xf32>
    %cst_37 = arith.constant 1.000000e+00 : f32
    %112 = vector.broadcast %cst_37 : f32 to vector<8x128xf32>
    %113 = arith.addf %112, %111 : vector<8x128xf32>
    %114 = arith.divf %112, %113 : vector<8x128xf32>
    %115 = math.tanh %109 : vector<8x128xf32>
    %116 = vector.extract_strided_slice %114 {offsets = [0, 0], sizes = [8, 32], strides = [1, 1]} : vector<8x128xf32> to vector<8x32xf32>
    %117 = vector.extract_strided_slice %114 {offsets = [0, 32], sizes = [8, 32], strides = [1, 1]} : vector<8x128xf32> to vector<8x32xf32>
    %118 = vector.extract_strided_slice %115 {offsets = [0, 64], sizes = [8, 32], strides = [1, 1]} : vector<8x128xf32> to vector<8x32xf32>
    %119 = vector.extract_strided_slice %114 {offsets = [0, 96], sizes = [8, 32], strides = [1, 1]} : vector<8x128xf32> to vector<8x32xf32>
    %120 = arith.mulf %117, %99 : vector<8x32xf32>
    %121 = arith.mulf %116, %118 : vector<8x32xf32>
    %122 = arith.addf %120, %121 : vector<8x32xf32>
    %123 = math.tanh %122 : vector<8x32xf32>
    %124 = arith.mulf %119, %123 : vector<8x32xf32>
    %125 = arith.index_cast %105 : i32 to index
    %c0_38 = arith.constant 0 : index
    %126 = vector.load %arg17[%125, %c0_38] : memref<64x32xf32, #tpu.memory_space<vmem>>, vector<8x32xf32>
    tpu.vector_store %arg17[%125, %c0_38], %124 {strides = array<i32>} : memref<64x32xf32, #tpu.memory_space<vmem>>, vector<8x32xf32>,
    %c5_i32 = arith.constant 5 : i32
    %c8_i32_39 = arith.constant 8 : i32
    %127 = arith.muli %c5_i32, %c8_i32_39 : i32
    %128 = tpu.assume_multiple %127, 8 : i32
    %129 = arith.index_cast %128 : i32 to index
    %c0_40 = arith.constant 0 : index
    %130 = vector.load %arg16[%129, %c0_40] : memref<64x128xf32, #tpu.memory_space<vmem>>, vector<8x128xf32>
    %cst_41 = arith.constant dense<0.000000e+00> : vector<8x128xf32>
    %131 = tpu.matmul %124, %0, %cst_41 {dimension_numbers = #tpu.dot_dimension_numbers<[1], [0], [0], [1], [0, 0, 1, 1], [], []>} : vector<8x32xf32>, vector<32x128xf32>, vector<8x128xf32> -> vector<8x128xf32>
    %132 = arith.addf %130, %131 : vector<8x128xf32>
    %133 = arith.negf %132 : vector<8x128xf32>
    %134 = math.exp %133 : vector<8x128xf32>
    %cst_42 = arith.constant 1.000000e+00 : f32
    %135 = vector.broadcast %cst_42 : f32 to vector<8x128xf32>
    %136 = arith.addf %135, %134 : vector<8x128xf32>
    %137 = arith.divf %135, %136 : vector<8x128xf32>
    %138 = math.tanh %132 : vector<8x128xf32>
    %139 = vector.extract_strided_slice %137 {offsets = [0, 0], sizes = [8, 32], strides = [1, 1]} : vector<8x128xf32> to vector<8x32xf32>
    %140 = vector.extract_strided_slice %137 {offsets = [0, 32], sizes = [8, 32], strides = [1, 1]} : vector<8x128xf32> to vector<8x32xf32>
    %141 = vector.extract_strided_slice %138 {offsets = [0, 64], sizes = [8, 32], strides = [1, 1]} : vector<8x128xf32> to vector<8x32xf32>
    %142 = vector.extract_strided_slice %137 {offsets = [0, 96], sizes = [8, 32], strides = [1, 1]} : vector<8x128xf32> to vector<8x32xf32>
    %143 = arith.mulf %140, %122 : vector<8x32xf32>
    %144 = arith.mulf %139, %141 : vector<8x32xf32>
    %145 = arith.addf %143, %144 : vector<8x32xf32>
    %146 = math.tanh %145 : vector<8x32xf32>
    %147 = arith.mulf %142, %146 : vector<8x32xf32>
    %148 = arith.index_cast %128 : i32 to index
    %c0_43 = arith.constant 0 : index
    %149 = vector.load %arg17[%148, %c0_43] : memref<64x32xf32, #tpu.memory_space<vmem>>, vector<8x32xf32>
    tpu.vector_store %arg17[%148, %c0_43], %147 {strides = array<i32>} : memref<64x32xf32, #tpu.memory_space<vmem>>, vector<8x32xf32>,
    %c6_i32 = arith.constant 6 : i32
    %c8_i32_44 = arith.constant 8 : i32
    %150 = arith.muli %c6_i32, %c8_i32_44 : i32
    %151 = tpu.assume_multiple %150, 8 : i32
    %152 = arith.index_cast %151 : i32 to index
    %c0_45 = arith.constant 0 : index
    %153 = vector.load %arg16[%152, %c0_45] : memref<64x128xf32, #tpu.memory_space<vmem>>, vector<8x128xf32>
    %cst_46 = arith.constant dense<0.000000e+00> : vector<8x128xf32>
    %154 = tpu.matmul %147, %0, %cst_46 {dimension_numbers = #tpu.dot_dimension_numbers<[1], [0], [0], [1], [0, 0, 1, 1], [], []>} : vector<8x32xf32>, vector<32x128xf32>, vector<8x128xf32> -> vector<8x128xf32>
    %155 = arith.addf %153, %154 : vector<8x128xf32>
    %156 = arith.negf %155 : vector<8x128xf32>
    %157 = math.exp %156 : vector<8x128xf32>
    %cst_47 = arith.constant 1.000000e+00 : f32
    %158 = vector.broadcast %cst_47 : f32 to vector<8x128xf32>
    %159 = arith.addf %158, %157 : vector<8x128xf32>
    %160 = arith.divf %158, %159 : vector<8x128xf32>
    %161 = math.tanh %155 : vector<8x128xf32>
    %162 = vector.extract_strided_slice %160 {offsets = [0, 0], sizes = [8, 32], strides = [1, 1]} : vector<8x128xf32> to vector<8x32xf32>
    %163 = vector.extract_strided_slice %160 {offsets = [0, 32], sizes = [8, 32], strides = [1, 1]} : vector<8x128xf32> to vector<8x32xf32>
    %164 = vector.extract_strided_slice %161 {offsets = [0, 64], sizes = [8, 32], strides = [1, 1]} : vector<8x128xf32> to vector<8x32xf32>
    %165 = vector.extract_strided_slice %160 {offsets = [0, 96], sizes = [8, 32], strides = [1, 1]} : vector<8x128xf32> to vector<8x32xf32>
    %166 = arith.mulf %163, %145 : vector<8x32xf32>
    %167 = arith.mulf %162, %164 : vector<8x32xf32>
    %168 = arith.addf %166, %167 : vector<8x32xf32>
    %169 = math.tanh %168 : vector<8x32xf32>
    %170 = arith.mulf %165, %169 : vector<8x32xf32>
    %171 = arith.index_cast %151 : i32 to index
    %c0_48 = arith.constant 0 : index
    %172 = vector.load %arg17[%171, %c0_48] : memref<64x32xf32, #tpu.memory_space<vmem>>, vector<8x32xf32>
    tpu.vector_store %arg17[%171, %c0_48], %170 {strides = array<i32>} : memref<64x32xf32, #tpu.memory_space<vmem>>, vector<8x32xf32>,
    %c7_i32 = arith.constant 7 : i32
    %c8_i32_49 = arith.constant 8 : i32
    %173 = arith.muli %c7_i32, %c8_i32_49 : i32
    %174 = tpu.assume_multiple %173, 8 : i32
    %175 = arith.index_cast %174 : i32 to index
    %c0_50 = arith.constant 0 : index
    %176 = vector.load %arg16[%175, %c0_50] : memref<64x128xf32, #tpu.memory_space<vmem>>, vector<8x128xf32>
    %cst_51 = arith.constant dense<0.000000e+00> : vector<8x128xf32>
    %177 = tpu.matmul %170, %0, %cst_51 {dimension_numbers = #tpu.dot_dimension_numbers<[1], [0], [0], [1], [0, 0, 1, 1], [], []>} : vector<8x32xf32>, vector<32x128xf32>, vector<8x128xf32> -> vector<8x128xf32>
    %178 = arith.addf %176, %177 : vector<8x128xf32>
    %179 = arith.negf %178 : vector<8x128xf32>
    %180 = math.exp %179 : vector<8x128xf32>
    %cst_52 = arith.constant 1.000000e+00 : f32
    %181 = vector.broadcast %cst_52 : f32 to vector<8x128xf32>
    %182 = arith.addf %181, %180 : vector<8x128xf32>
    %183 = arith.divf %181, %182 : vector<8x128xf32>
    %184 = math.tanh %178 : vector<8x128xf32>
    %185 = vector.extract_strided_slice %183 {offsets = [0, 0], sizes = [8, 32], strides = [1, 1]} : vector<8x128xf32> to vector<8x32xf32>
    %186 = vector.extract_strided_slice %183 {offsets = [0, 32], sizes = [8, 32], strides = [1, 1]} : vector<8x128xf32> to vector<8x32xf32>
    %187 = vector.extract_strided_slice %184 {offsets = [0, 64], sizes = [8, 32], strides = [1, 1]} : vector<8x128xf32> to vector<8x32xf32>
    %188 = vector.extract_strided_slice %183 {offsets = [0, 96], sizes = [8, 32], strides = [1, 1]} : vector<8x128xf32> to vector<8x32xf32>
    %189 = arith.mulf %186, %168 : vector<8x32xf32>
    %190 = arith.mulf %185, %187 : vector<8x32xf32>
    %191 = arith.addf %189, %190 : vector<8x32xf32>
    %192 = math.tanh %191 : vector<8x32xf32>
    %193 = arith.mulf %188, %192 : vector<8x32xf32>
    %194 = arith.index_cast %174 : i32 to index
    %c0_53 = arith.constant 0 : index
    %195 = vector.load %arg17[%194, %c0_53] : memref<64x32xf32, #tpu.memory_space<vmem>>, vector<8x32xf32>
    tpu.vector_store %arg17[%194, %c0_53], %193 {strides = array<i32>} : memref<64x32xf32, #tpu.memory_space<vmem>>, vector<8x32xf32>,
    %c8_i32_54 = arith.constant 8 : i32
    %c0_55 = arith.constant 0 : index
    %c0_56 = arith.constant 0 : index
    %c0_57 = arith.constant 0 : index
    %196 = vector.load %arg14[%c0_55, %c0_56, %c0_57] : memref<2x8x32xf32, #tpu.memory_space<vmem>>, vector<1x8x32xf32>
    %197 = vector.shape_cast %196 : vector<1x8x32xf32> to vector<8x32xf32>
    %198 = vector.shape_cast %193 : vector<8x32xf32> to vector<1x8x32xf32>
    tpu.vector_store %arg14[%c0_55, %c0_56, %c0_57], %198 {strides = array<i32>} : memref<2x8x32xf32, #tpu.memory_space<vmem>>, vector<1x8x32xf32>,
    %c0_58 = arith.constant 0 : index
    %c0_59 = arith.constant 0 : index
    %c0_60 = arith.constant 0 : index
    %199 = vector.load %arg15[%c0_58, %c0_59, %c0_60] : memref<2x8x32xf32, #tpu.memory_space<vmem>>, vector<1x8x32xf32>
    %200 = vector.shape_cast %199 : vector<1x8x32xf32> to vector<8x32xf32>
    %201 = vector.shape_cast %191 : vector<8x32xf32> to vector<1x8x32xf32>
    tpu.vector_store %arg15[%c0_58, %c0_59, %c0_60], %201 {strides = array<i32>} : memref<2x8x32xf32, #tpu.memory_space<vmem>>, vector<1x8x32xf32>,
    %c0_61 = arith.constant 0 : index
    %c0_62 = arith.constant 0 : index
    %202 = vector.load %arg7[%c0_61, %c0_62] : memref<32x128xf32, #tpu.memory_space<vmem>>, vector<32x128xf32>
    %c0_63 = arith.constant 0 : index
    %c0_64 = arith.constant 0 : index
    %203 = vector.load %arg17[%c0_63, %c0_64] : memref<64x32xf32, #tpu.memory_space<vmem>>, vector<64x32xf32>
    %c0_65 = arith.constant 0 : index
    %c0_66 = arith.constant 0 : index
    %204 = vector.load %arg6[%c0_65, %c0_66] : memref<32x128xf32, #tpu.memory_space<vmem>>, vector<32x128xf32>
    %cst_67 = arith.constant dense<0.000000e+00> : vector<64x128xf32>
    %205 = tpu.matmul %203, %204, %cst_67 {dimension_numbers = #tpu.dot_dimension_numbers<[1], [0], [0], [1], [0, 0, 1, 1], [], []>} : vector<64x32xf32>, vector<32x128xf32>, vector<64x128xf32> -> vector<64x128xf32>
    %c0_68 = arith.constant 0 : index
    %c0_69 = arith.constant 0 : index
    %206 = vector.load %arg8[%c0_68, %c0_69] : memref<1x128xf32, #tpu.memory_space<vmem>>, vector<1x128xf32>
    %207 = vector.broadcast %206 : vector<1x128xf32> to vector<64x128xf32>
    %208 = arith.addf %205, %207 : vector<64x128xf32>
    %c0_70 = arith.constant 0 : index
    %c0_71 = arith.constant 0 : index
    %209 = vector.load %arg16[%c0_70, %c0_71] : memref<64x128xf32, #tpu.memory_space<vmem>>, vector<64x128xf32>
    tpu.vector_store %arg16[%c0_70, %c0_71], %208 {strides = array<i32>} : memref<64x128xf32, #tpu.memory_space<vmem>>, vector<64x128xf32>,
    %c1 = arith.constant 1 : index
    %c0_72 = arith.constant 0 : index
    %c0_73 = arith.constant 0 : index
    %210 = vector.load %arg1[%c1, %c0_72, %c0_73] : memref<2x8x32xf32, #tpu.memory_space<vmem>>, vector<1x8x32xf32>
    %211 = vector.shape_cast %210 : vector<1x8x32xf32> to vector<8x32xf32>
    %c1_74 = arith.constant 1 : index
    %c0_75 = arith.constant 0 : index
    %c0_76 = arith.constant 0 : index
    %212 = vector.load %arg2[%c1_74, %c0_75, %c0_76] : memref<2x8x32xf32, #tpu.memory_space<vmem>>, vector<1x8x32xf32>
    %213 = vector.shape_cast %212 : vector<1x8x32xf32> to vector<8x32xf32>
    %c0_i32_77 = arith.constant 0 : i32
    %c8_i32_78 = arith.constant 8 : i32
    %214 = arith.muli %c0_i32_77, %c8_i32_78 : i32
    %215 = tpu.assume_multiple %214, 8 : i32
    %216 = arith.index_cast %215 : i32 to index
    %c0_79 = arith.constant 0 : index
    %217 = vector.load %arg16[%216, %c0_79] : memref<64x128xf32, #tpu.memory_space<vmem>>, vector<8x128xf32>
    %cst_80 = arith.constant dense<0.000000e+00> : vector<8x128xf32>
    %218 = tpu.matmul %211, %202, %cst_80 {dimension_numbers = #tpu.dot_dimension_numbers<[1], [0], [0], [1], [0, 0, 1, 1], [], []>} : vector<8x32xf32>, vector<32x128xf32>, vector<8x128xf32> -> vector<8x128xf32>
    %219 = arith.addf %217, %218 : vector<8x128xf32>
    %220 = arith.negf %219 : vector<8x128xf32>
    %221 = math.exp %220 : vector<8x128xf32>
    %cst_81 = arith.constant 1.000000e+00 : f32
    %222 = vector.broadcast %cst_81 : f32 to vector<8x128xf32>
    %223 = arith.addf %222, %221 : vector<8x128xf32>
    %224 = arith.divf %222, %223 : vector<8x128xf32>
    %225 = math.tanh %219 : vector<8x128xf32>
    %226 = vector.extract_strided_slice %224 {offsets = [0, 0], sizes = [8, 32], strides = [1, 1]} : vector<8x128xf32> to vector<8x32xf32>
    %227 = vector.extract_strided_slice %224 {offsets = [0, 32], sizes = [8, 32], strides = [1, 1]} : vector<8x128xf32> to vector<8x32xf32>
    %228 = vector.extract_strided_slice %225 {offsets = [0, 64], sizes = [8, 32], strides = [1, 1]} : vector<8x128xf32> to vector<8x32xf32>
    %229 = vector.extract_strided_slice %224 {offsets = [0, 96], sizes = [8, 32], strides = [1, 1]} : vector<8x128xf32> to vector<8x32xf32>
    %230 = arith.mulf %227, %213 : vector<8x32xf32>
    %231 = arith.mulf %226, %228 : vector<8x32xf32>
    %232 = arith.addf %230, %231 : vector<8x32xf32>
    %233 = math.tanh %232 : vector<8x32xf32>
    %234 = arith.mulf %229, %233 : vector<8x32xf32>
    %c1_i32_82 = arith.constant 1 : i32
    %c8_i32_83 = arith.constant 8 : i32
    %235 = arith.muli %c1_i32_82, %c8_i32_83 : i32
    %236 = tpu.assume_multiple %235, 8 : i32
    %237 = arith.index_cast %236 : i32 to index
    %c0_84 = arith.constant 0 : index
    %238 = vector.load %arg16[%237, %c0_84] : memref<64x128xf32, #tpu.memory_space<vmem>>, vector<8x128xf32>
    %cst_85 = arith.constant dense<0.000000e+00> : vector<8x128xf32>
    %239 = tpu.matmul %234, %202, %cst_85 {dimension_numbers = #tpu.dot_dimension_numbers<[1], [0], [0], [1], [0, 0, 1, 1], [], []>} : vector<8x32xf32>, vector<32x128xf32>, vector<8x128xf32> -> vector<8x128xf32>
    %240 = arith.addf %238, %239 : vector<8x128xf32>
    %241 = arith.negf %240 : vector<8x128xf32>
    %242 = math.exp %241 : vector<8x128xf32>
    %cst_86 = arith.constant 1.000000e+00 : f32
    %243 = vector.broadcast %cst_86 : f32 to vector<8x128xf32>
    %244 = arith.addf %243, %242 : vector<8x128xf32>
    %245 = arith.divf %243, %244 : vector<8x128xf32>
    %246 = math.tanh %240 : vector<8x128xf32>
    %247 = vector.extract_strided_slice %245 {offsets = [0, 0], sizes = [8, 32], strides = [1, 1]} : vector<8x128xf32> to vector<8x32xf32>
    %248 = vector.extract_strided_slice %245 {offsets = [0, 32], sizes = [8, 32], strides = [1, 1]} : vector<8x128xf32> to vector<8x32xf32>
    %249 = vector.extract_strided_slice %246 {offsets = [0, 64], sizes = [8, 32], strides = [1, 1]} : vector<8x128xf32> to vector<8x32xf32>
    %250 = vector.extract_strided_slice %245 {offsets = [0, 96], sizes = [8, 32], strides = [1, 1]} : vector<8x128xf32> to vector<8x32xf32>
    %251 = arith.mulf %248, %232 : vector<8x32xf32>
    %252 = arith.mulf %247, %249 : vector<8x32xf32>
    %253 = arith.addf %251, %252 : vector<8x32xf32>
    %254 = math.tanh %253 : vector<8x32xf32>
    %255 = arith.mulf %250, %254 : vector<8x32xf32>
    %c2_i32_87 = arith.constant 2 : i32
    %c8_i32_88 = arith.constant 8 : i32
    %256 = arith.muli %c2_i32_87, %c8_i32_88 : i32
    %257 = tpu.assume_multiple %256, 8 : i32
    %258 = arith.index_cast %257 : i32 to index
    %c0_89 = arith.constant 0 : index
    %259 = vector.load %arg16[%258, %c0_89] : memref<64x128xf32, #tpu.memory_space<vmem>>, vector<8x128xf32>
    %cst_90 = arith.constant dense<0.000000e+00> : vector<8x128xf32>
    %260 = tpu.matmul %255, %202, %cst_90 {dimension_numbers = #tpu.dot_dimension_numbers<[1], [0], [0], [1], [0, 0, 1, 1], [], []>} : vector<8x32xf32>, vector<32x128xf32>, vector<8x128xf32> -> vector<8x128xf32>
    %261 = arith.addf %259, %260 : vector<8x128xf32>
    %262 = arith.negf %261 : vector<8x128xf32>
    %263 = math.exp %262 : vector<8x128xf32>
    %cst_91 = arith.constant 1.000000e+00 : f32
    %264 = vector.broadcast %cst_91 : f32 to vector<8x128xf32>
    %265 = arith.addf %264, %263 : vector<8x128xf32>
    %266 = arith.divf %264, %265 : vector<8x128xf32>
    %267 = math.tanh %261 : vector<8x128xf32>
    %268 = vector.extract_strided_slice %266 {offsets = [0, 0], sizes = [8, 32], strides = [1, 1]} : vector<8x128xf32> to vector<8x32xf32>
    %269 = vector.extract_strided_slice %266 {offsets = [0, 32], sizes = [8, 32], strides = [1, 1]} : vector<8x128xf32> to vector<8x32xf32>
    %270 = vector.extract_strided_slice %267 {offsets = [0, 64], sizes = [8, 32], strides = [1, 1]} : vector<8x128xf32> to vector<8x32xf32>
    %271 = vector.extract_strided_slice %266 {offsets = [0, 96], sizes = [8, 32], strides = [1, 1]} : vector<8x128xf32> to vector<8x32xf32>
    %272 = arith.mulf %269, %253 : vector<8x32xf32>
    %273 = arith.mulf %268, %270 : vector<8x32xf32>
    %274 = arith.addf %272, %273 : vector<8x32xf32>
    %275 = math.tanh %274 : vector<8x32xf32>
    %276 = arith.mulf %271, %275 : vector<8x32xf32>
    %c3_i32_92 = arith.constant 3 : i32
    %c8_i32_93 = arith.constant 8 : i32
    %277 = arith.muli %c3_i32_92, %c8_i32_93 : i32
    %278 = tpu.assume_multiple %277, 8 : i32
    %279 = arith.index_cast %278 : i32 to index
    %c0_94 = arith.constant 0 : index
    %280 = vector.load %arg16[%279, %c0_94] : memref<64x128xf32, #tpu.memory_space<vmem>>, vector<8x128xf32>
    %cst_95 = arith.constant dense<0.000000e+00> : vector<8x128xf32>
    %281 = tpu.matmul %276, %202, %cst_95 {dimension_numbers = #tpu.dot_dimension_numbers<[1], [0], [0], [1], [0, 0, 1, 1], [], []>} : vector<8x32xf32>, vector<32x128xf32>, vector<8x128xf32> -> vector<8x128xf32>
    %282 = arith.addf %280, %281 : vector<8x128xf32>
    %283 = arith.negf %282 : vector<8x128xf32>
    %284 = math.exp %283 : vector<8x128xf32>
    %cst_96 = arith.constant 1.000000e+00 : f32
    %285 = vector.broadcast %cst_96 : f32 to vector<8x128xf32>
    %286 = arith.addf %285, %284 : vector<8x128xf32>
    %287 = arith.divf %285, %286 : vector<8x128xf32>
    %288 = math.tanh %282 : vector<8x128xf32>
    %289 = vector.extract_strided_slice %287 {offsets = [0, 0], sizes = [8, 32], strides = [1, 1]} : vector<8x128xf32> to vector<8x32xf32>
    %290 = vector.extract_strided_slice %287 {offsets = [0, 32], sizes = [8, 32], strides = [1, 1]} : vector<8x128xf32> to vector<8x32xf32>
    %291 = vector.extract_strided_slice %288 {offsets = [0, 64], sizes = [8, 32], strides = [1, 1]} : vector<8x128xf32> to vector<8x32xf32>
    %292 = vector.extract_strided_slice %287 {offsets = [0, 96], sizes = [8, 32], strides = [1, 1]} : vector<8x128xf32> to vector<8x32xf32>
    %293 = arith.mulf %290, %274 : vector<8x32xf32>
    %294 = arith.mulf %289, %291 : vector<8x32xf32>
    %295 = arith.addf %293, %294 : vector<8x32xf32>
    %296 = math.tanh %295 : vector<8x32xf32>
    %297 = arith.mulf %292, %296 : vector<8x32xf32>
    %c4_i32_97 = arith.constant 4 : i32
    %c8_i32_98 = arith.constant 8 : i32
    %298 = arith.muli %c4_i32_97, %c8_i32_98 : i32
    %299 = tpu.assume_multiple %298, 8 : i32
    %300 = arith.index_cast %299 : i32 to index
    %c0_99 = arith.constant 0 : index
    %301 = vector.load %arg16[%300, %c0_99] : memref<64x128xf32, #tpu.memory_space<vmem>>, vector<8x128xf32>
    %cst_100 = arith.constant dense<0.000000e+00> : vector<8x128xf32>
    %302 = tpu.matmul %297, %202, %cst_100 {dimension_numbers = #tpu.dot_dimension_numbers<[1], [0], [0], [1], [0, 0, 1, 1], [], []>} : vector<8x32xf32>, vector<32x128xf32>, vector<8x128xf32> -> vector<8x128xf32>
    %303 = arith.addf %301, %302 : vector<8x128xf32>
    %304 = arith.negf %303 : vector<8x128xf32>
    %305 = math.exp %304 : vector<8x128xf32>
    %cst_101 = arith.constant 1.000000e+00 : f32
    %306 = vector.broadcast %cst_101 : f32 to vector<8x128xf32>
    %307 = arith.addf %306, %305 : vector<8x128xf32>
    %308 = arith.divf %306, %307 : vector<8x128xf32>
    %309 = math.tanh %303 : vector<8x128xf32>
    %310 = vector.extract_strided_slice %308 {offsets = [0, 0], sizes = [8, 32], strides = [1, 1]} : vector<8x128xf32> to vector<8x32xf32>
    %311 = vector.extract_strided_slice %308 {offsets = [0, 32], sizes = [8, 32], strides = [1, 1]} : vector<8x128xf32> to vector<8x32xf32>
    %312 = vector.extract_strided_slice %309 {offsets = [0, 64], sizes = [8, 32], strides = [1, 1]} : vector<8x128xf32> to vector<8x32xf32>
    %313 = vector.extract_strided_slice %308 {offsets = [0, 96], sizes = [8, 32], strides = [1, 1]} : vector<8x128xf32> to vector<8x32xf32>
    %314 = arith.mulf %311, %295 : vector<8x32xf32>
    %315 = arith.mulf %310, %312 : vector<8x32xf32>
    %316 = arith.addf %314, %315 : vector<8x32xf32>
    %317 = math.tanh %316 : vector<8x32xf32>
    %318 = arith.mulf %313, %317 : vector<8x32xf32>
    %c5_i32_102 = arith.constant 5 : i32
    %c8_i32_103 = arith.constant 8 : i32
    %319 = arith.muli %c5_i32_102, %c8_i32_103 : i32
    %320 = tpu.assume_multiple %319, 8 : i32
    %321 = arith.index_cast %320 : i32 to index
    %c0_104 = arith.constant 0 : index
    %322 = vector.load %arg16[%321, %c0_104] : memref<64x128xf32, #tpu.memory_space<vmem>>, vector<8x128xf32>
    %cst_105 = arith.constant dense<0.000000e+00> : vector<8x128xf32>
    %323 = tpu.matmul %318, %202, %cst_105 {dimension_numbers = #tpu.dot_dimension_numbers<[1], [0], [0], [1], [0, 0, 1, 1], [], []>} : vector<8x32xf32>, vector<32x128xf32>, vector<8x128xf32> -> vector<8x128xf32>
    %324 = arith.addf %322, %323 : vector<8x128xf32>
    %325 = arith.negf %324 : vector<8x128xf32>
    %326 = math.exp %325 : vector<8x128xf32>
    %cst_106 = arith.constant 1.000000e+00 : f32
    %327 = vector.broadcast %cst_106 : f32 to vector<8x128xf32>
    %328 = arith.addf %327, %326 : vector<8x128xf32>
    %329 = arith.divf %327, %328 : vector<8x128xf32>
    %330 = math.tanh %324 : vector<8x128xf32>
    %331 = vector.extract_strided_slice %329 {offsets = [0, 0], sizes = [8, 32], strides = [1, 1]} : vector<8x128xf32> to vector<8x32xf32>
    %332 = vector.extract_strided_slice %329 {offsets = [0, 32], sizes = [8, 32], strides = [1, 1]} : vector<8x128xf32> to vector<8x32xf32>
    %333 = vector.extract_strided_slice %330 {offsets = [0, 64], sizes = [8, 32], strides = [1, 1]} : vector<8x128xf32> to vector<8x32xf32>
    %334 = vector.extract_strided_slice %329 {offsets = [0, 96], sizes = [8, 32], strides = [1, 1]} : vector<8x128xf32> to vector<8x32xf32>
    %335 = arith.mulf %332, %316 : vector<8x32xf32>
    %336 = arith.mulf %331, %333 : vector<8x32xf32>
    %337 = arith.addf %335, %336 : vector<8x32xf32>
    %338 = math.tanh %337 : vector<8x32xf32>
    %339 = arith.mulf %334, %338 : vector<8x32xf32>
    %c6_i32_107 = arith.constant 6 : i32
    %c8_i32_108 = arith.constant 8 : i32
    %340 = arith.muli %c6_i32_107, %c8_i32_108 : i32
    %341 = tpu.assume_multiple %340, 8 : i32
    %342 = arith.index_cast %341 : i32 to index
    %c0_109 = arith.constant 0 : index
    %343 = vector.load %arg16[%342, %c0_109] : memref<64x128xf32, #tpu.memory_space<vmem>>, vector<8x128xf32>
    %cst_110 = arith.constant dense<0.000000e+00> : vector<8x128xf32>
    %344 = tpu.matmul %339, %202, %cst_110 {dimension_numbers = #tpu.dot_dimension_numbers<[1], [0], [0], [1], [0, 0, 1, 1], [], []>} : vector<8x32xf32>, vector<32x128xf32>, vector<8x128xf32> -> vector<8x128xf32>
    %345 = arith.addf %343, %344 : vector<8x128xf32>
    %346 = arith.negf %345 : vector<8x128xf32>
    %347 = math.exp %346 : vector<8x128xf32>
    %cst_111 = arith.constant 1.000000e+00 : f32
    %348 = vector.broadcast %cst_111 : f32 to vector<8x128xf32>
    %349 = arith.addf %348, %347 : vector<8x128xf32>
    %350 = arith.divf %348, %349 : vector<8x128xf32>
    %351 = math.tanh %345 : vector<8x128xf32>
    %352 = vector.extract_strided_slice %350 {offsets = [0, 0], sizes = [8, 32], strides = [1, 1]} : vector<8x128xf32> to vector<8x32xf32>
    %353 = vector.extract_strided_slice %350 {offsets = [0, 32], sizes = [8, 32], strides = [1, 1]} : vector<8x128xf32> to vector<8x32xf32>
    %354 = vector.extract_strided_slice %351 {offsets = [0, 64], sizes = [8, 32], strides = [1, 1]} : vector<8x128xf32> to vector<8x32xf32>
    %355 = vector.extract_strided_slice %350 {offsets = [0, 96], sizes = [8, 32], strides = [1, 1]} : vector<8x128xf32> to vector<8x32xf32>
    %356 = arith.mulf %353, %337 : vector<8x32xf32>
    %357 = arith.mulf %352, %354 : vector<8x32xf32>
    %358 = arith.addf %356, %357 : vector<8x32xf32>
    %359 = math.tanh %358 : vector<8x32xf32>
    %360 = arith.mulf %355, %359 : vector<8x32xf32>
    %c7_i32_112 = arith.constant 7 : i32
    %c8_i32_113 = arith.constant 8 : i32
    %361 = arith.muli %c7_i32_112, %c8_i32_113 : i32
    %362 = tpu.assume_multiple %361, 8 : i32
    %363 = arith.index_cast %362 : i32 to index
    %c0_114 = arith.constant 0 : index
    %364 = vector.load %arg16[%363, %c0_114] : memref<64x128xf32, #tpu.memory_space<vmem>>, vector<8x128xf32>
    %cst_115 = arith.constant dense<0.000000e+00> : vector<8x128xf32>
    %365 = tpu.matmul %360, %202, %cst_115 {dimension_numbers = #tpu.dot_dimension_numbers<[1], [0], [0], [1], [0, 0, 1, 1], [], []>} : vector<8x32xf32>, vector<32x128xf32>, vector<8x128xf32> -> vector<8x128xf32>
    %366 = arith.addf %364, %365 : vector<8x128xf32>
    %367 = arith.negf %366 : vector<8x128xf32>
    %368 = math.exp %367 : vector<8x128xf32>
    %cst_116 = arith.constant 1.000000e+00 : f32
    %369 = vector.broadcast %cst_116 : f32 to vector<8x128xf32>
    %370 = arith.addf %369, %368 : vector<8x128xf32>
    %371 = arith.divf %369, %370 : vector<8x128xf32>
    %372 = math.tanh %366 : vector<8x128xf32>
    %373 = vector.extract_strided_slice %371 {offsets = [0, 0], sizes = [8, 32], strides = [1, 1]} : vector<8x128xf32> to vector<8x32xf32>
    %374 = vector.extract_strided_slice %371 {offsets = [0, 32], sizes = [8, 32], strides = [1, 1]} : vector<8x128xf32> to vector<8x32xf32>
    %375 = vector.extract_strided_slice %372 {offsets = [0, 64], sizes = [8, 32], strides = [1, 1]} : vector<8x128xf32> to vector<8x32xf32>
    %376 = vector.extract_strided_slice %371 {offsets = [0, 96], sizes = [8, 32], strides = [1, 1]} : vector<8x128xf32> to vector<8x32xf32>
    %377 = arith.mulf %374, %358 : vector<8x32xf32>
    %378 = arith.mulf %373, %375 : vector<8x32xf32>
    %379 = arith.addf %377, %378 : vector<8x32xf32>
    %380 = math.tanh %379 : vector<8x32xf32>
    %381 = arith.mulf %376, %380 : vector<8x32xf32>
    %c8_i32_117 = arith.constant 8 : i32
    %c1_118 = arith.constant 1 : index
    %c0_119 = arith.constant 0 : index
    %c0_120 = arith.constant 0 : index
    %382 = vector.load %arg14[%c1_118, %c0_119, %c0_120] : memref<2x8x32xf32, #tpu.memory_space<vmem>>, vector<1x8x32xf32>
    %383 = vector.shape_cast %382 : vector<1x8x32xf32> to vector<8x32xf32>
    %384 = vector.shape_cast %381 : vector<8x32xf32> to vector<1x8x32xf32>
    tpu.vector_store %arg14[%c1_118, %c0_119, %c0_120], %384 {strides = array<i32>} : memref<2x8x32xf32, #tpu.memory_space<vmem>>, vector<1x8x32xf32>,
    %c1_121 = arith.constant 1 : index
    %c0_122 = arith.constant 0 : index
    %c0_123 = arith.constant 0 : index
    %385 = vector.load %arg15[%c1_121, %c0_122, %c0_123] : memref<2x8x32xf32, #tpu.memory_space<vmem>>, vector<1x8x32xf32>
    %386 = vector.shape_cast %385 : vector<1x8x32xf32> to vector<8x32xf32>
    %387 = vector.shape_cast %379 : vector<8x32xf32> to vector<1x8x32xf32>
    tpu.vector_store %arg15[%c1_121, %c0_122, %c0_123], %387 {strides = array<i32>} : memref<2x8x32xf32, #tpu.memory_space<vmem>>, vector<1x8x32xf32>,
    %c0_124 = arith.constant 0 : index
    %c0_125 = arith.constant 0 : index
    %388 = vector.load %arg9[%c0_124, %c0_125] : memref<32x32xf32, #tpu.memory_space<vmem>>, vector<32x32xf32>
    %cst_126 = arith.constant dense<0.000000e+00> : vector<8x32xf32>
    %389 = tpu.matmul %381, %388, %cst_126 {dimension_numbers = #tpu.dot_dimension_numbers<[1], [0], [0], [1], [0, 0, 1, 1], [], []>} : vector<8x32xf32>, vector<32x32xf32>, vector<8x32xf32> -> vector<8x32xf32>
    %c0_127 = arith.constant 0 : index
    %c0_128 = arith.constant 0 : index
    %390 = vector.load %arg10[%c0_127, %c0_128] : memref<1x32xf32, #tpu.memory_space<vmem>>, vector<1x32xf32>
    %391 = vector.broadcast %390 : vector<1x32xf32> to vector<8x32xf32>
    %392 = arith.addf %389, %391 : vector<8x32xf32>
    %cst_129 = arith.constant 0.000000e+00 : f32
    %393 = vector.broadcast %cst_129 : f32 to vector<8x32xf32>
    %394 = arith.maximumf %392, %393 : vector<8x32xf32>
    %c0_130 = arith.constant 0 : index
    %c0_131 = arith.constant 0 : index
    %395 = vector.load %arg11[%c0_130, %c0_131] : memref<32x8xf32, #tpu.memory_space<vmem>>, vector<32x8xf32>
    %cst_132 = arith.constant dense<0.000000e+00> : vector<8x8xf32>
    %396 = tpu.matmul %394, %395, %cst_132 {dimension_numbers = #tpu.dot_dimension_numbers<[1], [0], [0], [1], [0, 0, 1, 1], [], []>} : vector<8x32xf32>, vector<32x8xf32>, vector<8x8xf32> -> vector<8x8xf32>
    %c0_133 = arith.constant 0 : index
    %c0_134 = arith.constant 0 : index
    %397 = vector.load %arg12[%c0_133, %c0_134] : memref<1x8xf32, #tpu.memory_space<vmem>>, vector<1x8xf32>
    %398 = vector.broadcast %397 : vector<1x8xf32> to vector<8x8xf32>
    %399 = arith.addf %396, %398 : vector<8x8xf32>
    %c0_135 = arith.constant 0 : index
    %c0_136 = arith.constant 0 : index
    %400 = vector.load %arg13[%c0_135, %c0_136] : memref<8x8xf32, #tpu.memory_space<vmem>>, vector<8x8xf32>
    tpu.vector_store %arg13[%c0_135, %c0_136], %399 {strides = array<i32>} : memref<8x8xf32, #tpu.memory_space<vmem>>, vector<8x8xf32>,
    return
  }
}

</mosaic_0001>

<llo_original>
// kernel: lstmnet_forward.1
$region0: #{lstmnet_forward.1}
  #allocation0 [shape = 'u32[]', space=smem, size = 0x4, offset = 0x4, fixed_abs, tag = 'smem constant byte address 0x4 - core index']
  #allocation1 [shape = 'u32[144,128]{1,0:T(1,128)}', space=vmem, size = 0x12000, scoped, tag = 'internal scratch']
  #allocation2 [shape = 'f32[64,128]{1,0:T(8,128)}', space=vmem, size = 0x8000, scoped, tag = 'scratch operand']
  #allocation3 [shape = 'f32[64,32]{1,0:T(8,128)}', space=vmem, size = 0x8000, scoped, tag = 'scratch operand']
  %s0 = inlined_call_operand.vmem [shape: f32[64,16], index: 0, kind: input, shape index: {}]
  %s1 = inlined_call_operand.vmem [shape: f32[2,8,32], index: 1, kind: input, shape index: {}]
  %s2 = inlined_call_operand.vmem [shape: f32[2,8,32], index: 2, kind: input, shape index: {}]
  %s3 = inlined_call_operand.vmem [shape: f32[16,128], index: 3, kind: input, shape index: {}]
  %s4 = inlined_call_operand.vmem [shape: f32[32,128], index: 4, kind: input, shape index: {}]
  %s5 = inlined_call_operand.vmem [shape: f32[1,128], index: 5, kind: input, shape index: {}]
  %s6 = inlined_call_operand.vmem [shape: f32[32,128], index: 6, kind: input, shape index: {}]
  %s7 = inlined_call_operand.vmem [shape: f32[32,128], index: 7, kind: input, shape index: {}]
  %s8 = inlined_call_operand.vmem [shape: f32[1,128], index: 8, kind: input, shape index: {}]
  %s9 = inlined_call_operand.vmem [shape: f32[32,32], index: 9, kind: input, shape index: {}]
  %s10 = inlined_call_operand.vmem [shape: f32[1,32], index: 10, kind: input, shape index: {}]
  %s11 = inlined_call_operand.vmem [shape: f32[32,8], index: 11, kind: input, shape index: {}]
  %s12 = inlined_call_operand.vmem [shape: f32[1,8], index: 12, kind: input, shape index: {}]
  %s13 = inlined_call_operand.vmem [shape: f32[8,8], index: 13, kind: output, shape index: {0}]
  %s14 = inlined_call_operand.vmem [shape: f32[2,8,32], index: 14, kind: output, shape index: {1}]
  %s15 = inlined_call_operand.vmem [shape: f32[2,8,32], index: 15, kind: output, shape index: {2}]
  %16 = xla_tuple %s13, %s14, %s15
  %s17 = sld [smem:[#allocation0]]
  $region78: #{lstmnet_forward.1} parent=0
    _
  %s19 = ssub.s32 1, %s17
  %s20 = scalar_select 0, %s19, %s17
  // Predicated region
  $region2: #{lstmnet_forward.1} parent=0 // pred_check
    _
  $region3: #{lstmnet_forward.1} parent=0 // pred_check_branch
    %22 = sbr.rel (0) target = $region5
  $region4: #{lstmnet_forward.1} parent=0 // pred_region
    _
  $region5: #{lstmnet_forward.1} parent=0 // pred_fallthru
    _
  // Predicated region
  $region6: #{lstmnet_forward.1} parent=0 // pred_check
    _
  $region7: #{lstmnet_forward.1} parent=0 // pred_check_branch
    %24 = sbr.rel (0) target = $region9
  $region8: #{lstmnet_forward.1} parent=0 // pred_region
    _
  $region9: #{lstmnet_forward.1} parent=0 // pred_fallthru
    _
  // Predicated region
  $region10: #{lstmnet_forward.1} parent=0 // pred_check
    _
  $region11: #{lstmnet_forward.1} parent=0 // pred_check_branch
    %26 = sbr.rel (0) target = $region13
  $region12: #{lstmnet_forward.1} parent=0 // pred_region
    _
  $region13: #{lstmnet_forward.1} parent=0 // pred_fallthru
    _
  // Predicated region
  $region14: #{lstmnet_forward.1} parent=0 // pred_check
    _
  $region15: #{lstmnet_forward.1} parent=0 // pred_check_branch
    %28 = sbr.rel (0) target = $region17
  $region16: #{lstmnet_forward.1} parent=0 // pred_region
    _
  $region17: #{lstmnet_forward.1} parent=0 // pred_fallthru
    _
  // Predicated region
  $region18: #{lstmnet_forward.1} parent=0 // pred_check
    _
  $region19: #{lstmnet_forward.1} parent=0 // pred_check_branch
    %30 = sbr.rel (0) target = $region21
  $region20: #{lstmnet_forward.1} parent=0 // pred_region
    _
  $region21: #{lstmnet_forward.1} parent=0 // pred_fallthru
    _
  // Predicated region
  $region22: #{lstmnet_forward.1} parent=0 // pred_check
    _
  $region23: #{lstmnet_forward.1} parent=0 // pred_check_branch
    %32 = sbr.rel (0) target = $region25
  $region24: #{lstmnet_forward.1} parent=0 // pred_region
    _
  $region25: #{lstmnet_forward.1} parent=0 // pred_fallthru
    _
  // Predicated region
  $region26: #{lstmnet_forward.1} parent=0 // pred_check
    _
  $region27: #{lstmnet_forward.1} parent=0 // pred_check_branch
    %34 = sbr.rel (0) target = $region29
  $region28: #{lstmnet_forward.1} parent=0 // pred_region
    _
  $region29: #{lstmnet_forward.1} parent=0 // pred_fallthru
    _
  // Predicated region
  $region30: #{lstmnet_forward.1} parent=0 // pred_check
    _
  $region31: #{lstmnet_forward.1} parent=0 // pred_check_branch
    %36 = sbr.rel (0) target = $region33
  $region32: #{lstmnet_forward.1} parent=0 // pred_region
    _
  $region33: #{lstmnet_forward.1} parent=0 // pred_fallthru
    _
  // Predicated region
  $region34: #{lstmnet_forward.1} parent=0 // pred_check
    _
  $region35: #{lstmnet_forward.1} parent=0 // pred_check_branch
    %38 = sbr.rel (0) target = $region37
  $region36: #{lstmnet_forward.1} parent=0 // pred_region
    _
  $region37: #{lstmnet_forward.1} parent=0 // pred_fallthru
    _
  // Predicated region
  $region38: #{lstmnet_forward.1} parent=0 // pred_check
    _
  $region39: #{lstmnet_forward.1} parent=0 // pred_check_branch
    %40 = sbr.rel (0) target = $region41
  $region40: #{lstmnet_forward.1} parent=0 // pred_region
    _
  $region41: #{lstmnet_forward.1} parent=0 // pred_fallthru
    _
  // Predicated region
  $region42: #{lstmnet_forward.1} parent=0 // pred_check
    _
  $region43: #{lstmnet_forward.1} parent=0 // pred_check_branch
    %42 = sbr.rel (0) target = $region45
  $region44: #{lstmnet_forward.1} parent=0 // pred_region
    _
  $region45: #{lstmnet_forward.1} parent=0 // pred_fallthru
    _
  // Predicated region
  $region46: #{lstmnet_forward.1} parent=0 // pred_check
    _
  $region47: #{lstmnet_forward.1} parent=0 // pred_check_branch
    %44 = sbr.rel (0) target = $region49
  $region48: #{lstmnet_forward.1} parent=0 // pred_region
    _
  $region49: #{lstmnet_forward.1} parent=0 // pred_fallthru
    _
  // Predicated region
  $region50: #{lstmnet_forward.1} parent=0 // pred_check
    _
  $region51: #{lstmnet_forward.1} parent=0 // pred_check_branch
    %46 = sbr.rel (0) target = $region53
  $region52: #{lstmnet_forward.1} parent=0 // pred_region
    _
  $region53: #{lstmnet_forward.1} parent=0 // pred_fallthru
    _
  %v47 = vld [vmem:[%s4] sm:$0xff]
  %v48 = vld [vmem:[%s4 + $0x8] sm:$0xff]
  %v49 = vld [vmem:[%s4 + $0x10] sm:$0xff]
  %v50 = vld [vmem:[%s4 + $0x18] sm:$0xff]
  %v51 = vld [vmem:[%s0] sm:$0xff]
  %v52 = vld [vmem:[%s0 + $0x8] sm:$0xff]
  %v53 = vld [vmem:[%s0 + $0x10] sm:$0xff]
  %v54 = vld [vmem:[%s0 + $0x18] sm:$0xff]
  %v55 = vld [vmem:[%s0 + $0x20] sm:$0xff]
  %v56 = vld [vmem:[%s0 + $0x28] sm:$0xff]
  %v57 = vld [vmem:[%s0 + $0x30] sm:$0xff]
  %v58 = vld [vmem:[%s0 + $0x38] sm:$0xff]
  %v59 = vld [vmem:[%s3] sm:$0xff]
  %v60 = vld [vmem:[%s3 + $0x8] sm:$0xff]
  %v61 = vld [vmem:[%s5] sm:$0x1]
  %v63 = vlaneseq
  %v64 = vshrl.u32 %v63, 7
  %v65 = vsub.s32 0, %v64
  %v66 = vrot.slane %v61, %v65
  %vm68 = vcmask 130048
  %v70 = vsel %vm68, %v51, 0
  %v73 = vsel %vm68, %v52, 0
  %v76 = vsel %vm68, %v53, 0
  %v79 = vsel %vm68, %v54, 0
  %v82 = vsel %vm68, %v55, 0
  %v85 = vsel %vm68, %v56, 0
  %v88 = vsel %vm68, %v57, 0
  %v91 = vsel %vm68, %v58, 0
  %93 = vmatprep.subr.mxu0 0.0
  %94 = vmatpush1.msra.mxu0 %v59
  %95 = vmatprep.subr.mxu0 0.0
  %96 = vmatpush1.msra.mxu0 %v60
  %97 = vmatprep.subr.mxu0 0.0
  %98 = vmatpush1.msra.mxu0 0.0
  %99 = vmatprep.subr.mxu0 0.0
  %100 = vmatpush1.msra.mxu0 0.0
  %101 = vmatprep.subr.mxu0 0.0
  %102 = vmatpush1.msra.mxu0 0.0
  %103 = vmatprep.subr.mxu0 0.0
  %104 = vmatpush1.msra.mxu0 0.0
  %105 = vmatprep.subr.mxu0 0.0
  %106 = vmatpush1.msra.mxu0 0.0
  %107 = vmatprep.subr.mxu0 0.0
  %108 = vmatpush1.msra.mxu0 0.0
  %109 = vmatprep.subr.mxu0 0.0
  %110 = vmatpush1.msra.mxu0 0.0
  %111 = vmatprep.subr.mxu0 0.0
  %112 = vmatpush1.msra.mxu0 0.0
  %113 = vmatprep.subr.mxu0 0.0
  %114 = vmatpush1.msra.mxu0 0.0
  %115 = vmatprep.subr.mxu0 0.0
  %116 = vmatpush1.msra.mxu0 0.0
  %117 = vmatprep.subr.mxu0 0.0
  %118 = vmatpush1.msra.mxu0 0.0
  %119 = vmatprep.subr.mxu0 0.0
  %120 = vmatpush1.msra.mxu0 0.0
  %121 = vmatprep.subr.mxu0 0.0
  %122 = vmatpush1.msra.mxu0 0.0
  %123 = vmatprep.subr.mxu0 0.0
  %124 = vmatpush1.msra.mxu0 0.0
  %125 = vmatprep.subr.mxu0 0.0
  %126 = vmatpush1.msra.mxu0 0.0
  %127 = vmatprep.subr.mxu0 0.0
  %128 = vmatpush1.msra.mxu0 0.0
  %129 = vmatprep.subr.mxu0 0.0
  %130 = vmatpush1.msra.mxu0 0.0
  %131 = vmatprep.subr.mxu0 0.0
  %132 = vmatpush1.msra.mxu0 0.0
  %133 = vmatprep.subr.mxu0 0.0
  %134 = vmatpush1.msra.mxu0 0.0
  %135 = vmatprep.subr.mxu0 0.0
  %136 = vmatpush1.msra.mxu0 0.0
  %137 = vmatprep.subr.mxu0 0.0
  %138 = vmatpush1.msra.mxu0 0.0
  %139 = vmatprep.subr.mxu0 0.0
  %140 = vmatpush1.msra.mxu0 0.0
  %141 = vmatprep.subr.mxu0 0.0
  %142 = vmatpush1.msra.mxu0 0.0
  %143 = vmatprep.subr.mxu0 0.0
  %144 = vmatpush1.msra.mxu0 0.0
  %145 = vmatprep.subr.mxu0 0.0
  %146 = vmatpush1.msra.mxu0 0.0
  %147 = vmatprep.subr.mxu0 0.0
  %148 = vmatpush1.msra.mxu0 0.0
  %149 = vmatprep.subr.mxu0 0.0
  %150 = vmatpush1.msra.mxu0 0.0
  %151 = vmatprep.subr.mxu0 0.0
  %152 = vmatpush1.msra.mxu0 0.0
  %153 = vmatprep.subr.mxu0 0.0
  %154 = vmatpush1.msra.mxu0 0.0
  %155 = vmatprep.subr.mxu0 0.0
  %156 = vmatpush1.msra.mxu0 0.0
  %157 = vmatprep.mubr.f32.mxu0 0.0
  %158 = vmatmul.mubr.f32.gmra.mrb[0].mxu0 %v70
  %v159 = vpop.f32.mrb[0].mxu0
  %v160 = vadd.f32 %v66, %v159
  %v161 = vpop.f32.mrb[0].mxu0
  %162 = vmatprep.mubr.f32.mxu0 0.0
  %163 = vmatmul.mubr.f32.gmra.mrb[0].mxu0 %v73
  %v164 = vpop.f32.mrb[0].mxu0
  %v165 = vadd.f32 %v66, %v164
  %v166 = vpop.f32.mrb[0].mxu0
  %167 = vmatprep.mubr.f32.mxu0 0.0
  %168 = vmatmul.mubr.f32.gmra.mrb[0].mxu0 %v76
  %v169 = vpop.f32.mrb[0].mxu0
  %v170 = vadd.f32 %v66, %v169
  %v171 = vpop.f32.mrb[0].mxu0
  %172 = vmatprep.mubr.f32.mxu0 0.0
  %173 = vmatmul.mubr.f32.gmra.mrb[0].mxu0 %v79
  %v174 = vpop.f32.mrb[0].mxu0
  %v175 = vadd.f32 %v66, %v174
  %v176 = vpop.f32.mrb[0].mxu0
  %177 = vmatprep.mubr.f32.mxu0 0.0
  %178 = vmatmul.mubr.f32.gmra.mrb[0].mxu0 %v82
  %v179 = vpop.f32.mrb[0].mxu0
  %v180 = vadd.f32 %v66, %v179
  %v181 = vpop.f32.mrb[0].mxu0
  %182 = vmatprep.mubr.f32.mxu0 0.0
  %183 = vmatmul.mubr.f32.gmra.mrb[0].mxu0 %v85
  %v184 = vpop.f32.mrb[0].mxu0
  %v185 = vadd.f32 %v66, %v184
  %v186 = vpop.f32.mrb[0].mxu0
  %187 = vmatprep.mubr.f32.mxu0 0.0
  %188 = vmatmul.mubr.f32.gmra.mrb[0].mxu0 %v88
  %v189 = vpop.f32.mrb[0].mxu0
  %v190 = vadd.f32 %v66, %v189
  %v191 = vpop.f32.mrb[0].mxu0
  %192 = vmatprep.mubr.f32.mxu0 0.0
  %193 = vmatmul.mubr.f32.gmra.mrb[0].mxu0 %v91
  %v194 = vpop.f32.mrb[0].mxu0
  %v195 = vadd.f32 %v66, %v194
  %v196 = vpop.f32.mrb[0].mxu0
  %197 = vdwg.mxu0
  %198 = vst [vmem:[#allocation2] sm:$0xff] %v160
  %199 = vst [vmem:[#allocation2 + $0x8] sm:$0xff] %v165
  %200 = vst [vmem:[#allocation2 + $0x10] sm:$0xff] %v170
  %201 = vst [vmem:[#allocation2 + $0x18] sm:$0xff] %v175
  %202 = vst [vmem:[#allocation2 + $0x20] sm:$0xff] %v180
  %203 = vst [vmem:[#allocation2 + $0x28] sm:$0xff] %v185
  %204 = vst [vmem:[#allocation2 + $0x30] sm:$0xff] %v190
  %205 = vst [vmem:[#allocation2 + $0x38] sm:$0xff] %v195
  %v206 = vld [vmem:[%s1] sm:$0xff]
  %v207 = vld [vmem:[%s2] sm:$0xff]
  %v208 = vld [vmem:[#allocation2] sm:$0xff]
  %vm209 = vcmask 261120
  %v211 = vsel %vm209, %v206, 0
  %213 = vmatprep.subr.mxu0 0.0
  %214 = vmatpush1.msra.mxu0 %v47
  %215 = vmatprep.subr.mxu0 0.0
  %216 = vmatpush1.msra.mxu0 %v48
  %217 = vmatprep.subr.mxu0 0.0
  %218 = vmatpush1.msra.mxu0 %v49
  %219 = vmatprep.subr.mxu0 0.0
  %220 = vmatpush1.msra.mxu0 %v50
  %221 = vmatprep.subr.mxu0 0.0
  %222 = vmatpush1.msra.mxu0 0.0
  %223 = vmatprep.subr.mxu0 0.0
  %224 = vmatpush1.msra.mxu0 0.0
  %225 = vmatprep.subr.mxu0 0.0
  %226 = vmatpush1.msra.mxu0 0.0
  %227 = vmatprep.subr.mxu0 0.0
  %228 = vmatpush1.msra.mxu0 0.0
  %229 = vmatprep.subr.mxu0 0.0
  %230 = vmatpush1.msra.mxu0 0.0
  %231 = vmatprep.subr.mxu0 0.0
  %232 = vmatpush1.msra.mxu0 0.0
  %233 = vmatprep.subr.mxu0 0.0
  %234 = vmatpush1.msra.mxu0 0.0
  %235 = vmatprep.subr.mxu0 0.0
  %236 = vmatpush1.msra.mxu0 0.0
  %237 = vmatprep.subr.mxu0 0.0
  %238 = vmatpush1.msra.mxu0 0.0
  %239 = vmatprep.subr.mxu0 0.0
  %240 = vmatpush1.msra.mxu0 0.0
  %241 = vmatprep.subr.mxu0 0.0
  %242 = vmatpush1.msra.mxu0 0.0
  %243 = vmatprep.subr.mxu0 0.0
  %244 = vmatpush1.msra.mxu0 0.0
  %245 = vmatprep.subr.mxu0 0.0
  %246 = vmatpush1.msra.mxu0 0.0
  %247 = vmatprep.subr.mxu0 0.0
  %248 = vmatpush1.msra.mxu0 0.0
  %249 = vmatprep.subr.mxu0 0.0
  %250 = vmatpush1.msra.mxu0 0.0
  %251 = vmatprep.subr.mxu0 0.0
  %252 = vmatpush1.msra.mxu0 0.0
  %253 = vmatprep.subr.mxu0 0.0
  %254 = vmatpush1.msra.mxu0 0.0
  %255 = vmatprep.subr.mxu0 0.0
  %256 = vmatpush1.msra.mxu0 0.0
  %257 = vmatprep.subr.mxu0 0.0
  %258 = vmatpush1.msra.mxu0 0.0
  %259 = vmatprep.subr.mxu0 0.0
  %260 = vmatpush1.msra.mxu0 0.0
  %261 = vmatprep.subr.mxu0 0.0
  %262 = vmatpush1.msra.mxu0 0.0
  %263 = vmatprep.subr.mxu0 0.0
  %264 = vmatpush1.msra.mxu0 0.0
  %265 = vmatprep.subr.mxu0 0.0
  %266 = vmatpush1.msra.mxu0 0.0
  %267 = vmatprep.subr.mxu0 0.0
  %268 = vmatpush1.msra.mxu0 0.0
  %269 = vmatprep.subr.mxu0 0.0
  %270 = vmatpush1.msra.mxu0 0.0
  %271 = vmatprep.subr.mxu0 0.0
  %272 = vmatpush1.msra.mxu0 0.0
  %273 = vmatprep.subr.mxu0 0.0
  %274 = vmatpush1.msra.mxu0 0.0
  %275 = vmatprep.subr.mxu0 0.0
  %276 = vmatpush1.msra.mxu0 0.0
  %277 = vmatprep.mubr.f32.mxu0 0.0
  %278 = vmatmul.mubr.f32.gmra.mrb[0].mxu0 %v211
  %v279 = vpop.f32.mrb[0].mxu0
  %v280 = vadd.f32 0.0, %v279
  %v281 = vpop.f32.mrb[0].mxu0
  %282 = vdwg.mxu0
  %v283 = vadd.f32 %v208, %v280
  %v284 = vxor.u32 %v283, 2147483648
  %v285 = vmul.f32 %v284, 1.442695
  %v286 = vpow.pop %v285
  %v287 = vadd.f32 %v286, 1.0
  %v288 = vrcp.pop %v287
  %v289 = vmul.f32 1.0, %v288
  %v290 = vtanh.pop %v283
  %292 = vrot.lane.b32.xlu0 %v207, 32
  %v293 = vpop.permute.xlu0 %292
  %v295 = vmul.f32 %v289, %v293
  %297 = vrot.lane.b32.xlu0 %v290, 64
  %v298 = vpop.permute.xlu0 %297
  %v300 = vmul.f32 %v289, %v298
  %302 = vrot.lane.b32.xlu0 %v300, 32
  %v303 = vpop.permute.xlu0 %302
  %v305 = vadd.f32 %v295, %v303
  %v306 = vtanh.pop %v305
  %308 = vrot.lane.b32.xlu0 %v306, 64
  %v309 = vpop.permute.xlu0 %308
  %v311 = vmul.f32 %v289, %v309
  %313 = vrot.lane.b32.xlu0 %v311, 32
  %v314 = vpop.permute.xlu0 %313
  %316 = vst.msk [vmem:[#allocation3] sm:$0xff] %vm209, %v314
  %s317 = scalar_lea.vmem [#allocation2], 8
  %v318 = vld [vmem:[%s317] sm:$0xff]
  %v319 = vsel %vm209, %v314, 0
  %321 = vmatprep.subr.mxu0 0.0
  %322 = vmatpush1.msra.mxu0 %v47
  %323 = vmatprep.subr.mxu0 0.0
  %324 = vmatpush1.msra.mxu0 %v48
  %325 = vmatprep.subr.mxu0 0.0
  %326 = vmatpush1.msra.mxu0 %v49
  %327 = vmatprep.subr.mxu0 0.0
  %328 = vmatpush1.msra.mxu0 %v50
  %329 = vmatprep.subr.mxu0 0.0
  %330 = vmatpush1.msra.mxu0 0.0
  %331 = vmatprep.subr.mxu0 0.0
  %332 = vmatpush1.msra.mxu0 0.0
  %333 = vmatprep.subr.mxu0 0.0
  %334 = vmatpush1.msra.mxu0 0.0
  %335 = vmatprep.subr.mxu0 0.0
  %336 = vmatpush1.msra.mxu0 0.0
  %337 = vmatprep.subr.mxu0 0.0
  %338 = vmatpush1.msra.mxu0 0.0
  %339 = vmatprep.subr.mxu0 0.0
  %340 = vmatpush1.msra.mxu0 0.0
  %341 = vmatprep.subr.mxu0 0.0
  %342 = vmatpush1.msra.mxu0 0.0
  %343 = vmatprep.subr.mxu0 0.0
  %344 = vmatpush1.msra.mxu0 0.0
  %345 = vmatprep.subr.mxu0 0.0
  %346 = vmatpush1.msra.mxu0 0.0
  %347 = vmatprep.subr.mxu0 0.0
  %348 = vmatpush1.msra.mxu0 0.0
  %349 = vmatprep.subr.mxu0 0.0
  %350 = vmatpush1.msra.mxu0 0.0
  %351 = vmatprep.subr.mxu0 0.0
  %352 = vmatpush1.msra.mxu0 0.0
  %353 = vmatprep.subr.mxu0 0.0
  %354 = vmatpush1.msra.mxu0 0.0
  %355 = vmatprep.subr.mxu0 0.0
  %356 = vmatpush1.msra.mxu0 0.0
  %357 = vmatprep.subr.mxu0 0.0
  %358 = vmatpush1.msra.mxu0 0.0
  %359 = vmatprep.subr.mxu0 0.0
  %360 = vmatpush1.msra.mxu0 0.0
  %361 = vmatprep.subr.mxu0 0.0
  %362 = vmatpush1.msra.mxu0 0.0
  %363 = vmatprep.subr.mxu0 0.0
  %364 = vmatpush1.msra.mxu0 0.0
  %365 = vmatprep.subr.mxu0 0.0
  %366 = vmatpush1.msra.mxu0 0.0
  %367 = vmatprep.subr.mxu0 0.0
  %368 = vmatpush1.msra.mxu0 0.0
  %369 = vmatprep.subr.mxu0 0.0
  %370 = vmatpush1.msra.mxu0 0.0
  %371 = vmatprep.subr.mxu0 0.0
  %372 = vmatpush1.msra.mxu0 0.0
  %373 = vmatprep.subr.mxu0 0.0
  %374 = vmatpush1.msra.mxu0 0.0
  %375 = vmatprep.subr.mxu0 0.0
  %376 = vmatpush1.msra.mxu0 0.0
  %377 = vmatprep.subr.mxu0 0.0
  %378 = vmatpush1.msra.mxu0 0.0
  %379 = vmatprep.subr.mxu0 0.0
  %380 = vmatpush1.msra.mxu0 0.0
  %381 = vmatprep.subr.mxu0 0.0
  %382 = vmatpush1.msra.mxu0 0.0
  %383 = vmatprep.subr.mxu0 0.0
  %384 = vmatpush1.msra.mxu0 0.0
  %385 = vmatprep.mubr.f32.mxu0 0.0
  %386 = vmatmul.mubr.f32.gmra.mrb[0].mxu0 %v319
  %v387 = vpop.f32.mrb[0].mxu0
  %v388 = vadd.f32 0.0, %v387
  %v389 = vpop.f32.mrb[0].mxu0
  %390 = vdwg.mxu0
  %v391 = vadd.f32 %v318, %v388
  %v392 = vxor.u32 %v391, 2147483648
  %v393 = vmul.f32 %v392, 1.442695
  %v394 = vpow.pop %v393
  %v395 = vadd.f32 %v394, 1.0
  %v396 = vrcp.pop %v395
  %v397 = vmul.f32 1.0, %v396
  %v398 = vtanh.pop %v391
  %v399 = vmul.f32 %v397, %v305
  %401 = vrot.lane.b32.xlu0 %v398, 64
  %v402 = vpop.permute.xlu0 %401
  %v404 = vmul.f32 %v397, %v402
  %406 = vrot.lane.b32.xlu0 %v404, 32
  %v407 = vpop.permute.xlu0 %406
  %v409 = vadd.f32 %v399, %v407
  %v410 = vtanh.pop %v409
  %412 = vrot.lane.b32.xlu0 %v410, 64
  %v413 = vpop.permute.xlu0 %412
  %v415 = vmul.f32 %v397, %v413
  %417 = vrot.lane.b32.xlu0 %v415, 32
  %v418 = vpop.permute.xlu0 %417
  %s420 = scalar_lea.vmem [#allocation3], 8
  %421 = vst.msk [vmem:[%s420] sm:$0xff] %vm209, %v418
  %s422 = scalar_lea.vmem [#allocation2], 16
  %v423 = vld [vmem:[%s422] sm:$0xff]
  %v424 = vsel %vm209, %v418, 0
  %426 = vmatprep.subr.mxu0 0.0
  %427 = vmatpush1.msra.mxu0 %v47
  %428 = vmatprep.subr.mxu0 0.0
  %429 = vmatpush1.msra.mxu0 %v48
  %430 = vmatprep.subr.mxu0 0.0
  %431 = vmatpush1.msra.mxu0 %v49
  %432 = vmatprep.subr.mxu0 0.0
  %433 = vmatpush1.msra.mxu0 %v50
  %434 = vmatprep.subr.mxu0 0.0
  %435 = vmatpush1.msra.mxu0 0.0
  %436 = vmatprep.subr.mxu0 0.0
  %437 = vmatpush1.msra.mxu0 0.0
  %438 = vmatprep.subr.mxu0 0.0
  %439 = vmatpush1.msra.mxu0 0.0
  %440 = vmatprep.subr.mxu0 0.0
  %441 = vmatpush1.msra.mxu0 0.0
  %442 = vmatprep.subr.mxu0 0.0
  %443 = vmatpush1.msra.mxu0 0.0
  %444 = vmatprep.subr.mxu0 0.0
  %445 = vmatpush1.msra.mxu0 0.0
  %446 = vmatprep.subr.mxu0 0.0
  %447 = vmatpush1.msra.mxu0 0.0
  %448 = vmatprep.subr.mxu0 0.0
  %449 = vmatpush1.msra.mxu0 0.0
  %450 = vmatprep.subr.mxu0 0.0
  %451 = vmatpush1.msra.mxu0 0.0
  %452 = vmatprep.subr.mxu0 0.0
  %453 = vmatpush1.msra.mxu0 0.0
  %454 = vmatprep.subr.mxu0 0.0
  %455 = vmatpush1.msra.mxu0 0.0
  %456 = vmatprep.subr.mxu0 0.0
  %457 = vmatpush1.msra.mxu0 0.0
  %458 = vmatprep.subr.mxu0 0.0
  %459 = vmatpush1.msra.mxu0 0.0
  %460 = vmatprep.subr.mxu0 0.0
  %461 = vmatpush1.msra.mxu0 0.0
  %462 = vmatprep.subr.mxu0 0.0
  %463 = vmatpush1.msra.mxu0 0.0
  %464 = vmatprep.subr.mxu0 0.0
  %465 = vmatpush1.msra.mxu0 0.0
  %466 = vmatprep.subr.mxu0 0.0
  %467 = vmatpush1.msra.mxu0 0.0
  %468 = vmatprep.subr.mxu0 0.0
  %469 = vmatpush1.msra.mxu0 0.0
  %470 = vmatprep.subr.mxu0 0.0
  %471 = vmatpush1.msra.mxu0 0.0
  %472 = vmatprep.subr.mxu0 0.0
  %473 = vmatpush1.msra.mxu0 0.0
  %474 = vmatprep.subr.mxu0 0.0
  %475 = vmatpush1.msra.mxu0 0.0
  %476 = vmatprep.subr.mxu0 0.0
  %477 = vmatpush1.msra.mxu0 0.0
  %478 = vmatprep.subr.mxu0 0.0
  %479 = vmatpush1.msra.mxu0 0.0
  %480 = vmatprep.subr.mxu0 0.0
  %481 = vmatpush1.msra.mxu0 0.0
  %482 = vmatprep.subr.mxu0 0.0
  %483 = vmatpush1.msra.mxu0 0.0
  %484 = vmatprep.subr.mxu0 0.0
  %485 = vmatpush1.msra.mxu0 0.0
  %486 = vmatprep.subr.mxu0 0.0
  %487 = vmatpush1.msra.mxu0 0.0
  %488 = vmatprep.subr.mxu0 0.0
  %489 = vmatpush1.msra.mxu0 0.0
  %490 = vmatprep.mubr.f32.mxu0 0.0
  %491 = vmatmul.mubr.f32.gmra.mrb[0].mxu0 %v424
  %v492 = vpop.f32.mrb[0].mxu0
  %v493 = vadd.f32 0.0, %v492
  %v494 = vpop.f32.mrb[0].mxu0
  %495 = vdwg.mxu0
  %v496 = vadd.f32 %v423, %v493
  %v497 = vxor.u32 %v496, 2147483648
  %v498 = vmul.f32 %v497, 1.442695
  %v499 = vpow.pop %v498
  %v500 = vadd.f32 %v499, 1.0
  %v501 = vrcp.pop %v500
  %v502 = vmul.f32 1.0, %v501
  %v503 = vtanh.pop %v496
  %v504 = vmul.f32 %v502, %v409
  %506 = vrot.lane.b32.xlu0 %v503, 64
  %v507 = vpop.permute.xlu0 %506
  %v509 = vmul.f32 %v502, %v507
  %511 = vrot.lane.b32.xlu0 %v509, 32
  %v512 = vpop.permute.xlu0 %511
  %v514 = vadd.f32 %v504, %v512
  %v515 = vtanh.pop %v514
  %517 = vrot.lane.b32.xlu0 %v515, 64
  %v518 = vpop.permute.xlu0 %517
  %v520 = vmul.f32 %v502, %v518
  %522 = vrot.lane.b32.xlu0 %v520, 32
  %v523 = vpop.permute.xlu0 %522
  %s525 = scalar_lea.vmem [#allocation3], 16
  %526 = vst.msk [vmem:[%s525] sm:$0xff] %vm209, %v523
  %s527 = scalar_lea.vmem [#allocation2], 24
  %v528 = vld [vmem:[%s527] sm:$0xff]
  %v529 = vsel %vm209, %v523, 0
  %531 = vmatprep.subr.mxu0 0.0
  %532 = vmatpush1.msra.mxu0 %v47
  %533 = vmatprep.subr.mxu0 0.0
  %534 = vmatpush1.msra.mxu0 %v48
  %535 = vmatprep.subr.mxu0 0.0
  %536 = vmatpush1.msra.mxu0 %v49
  %537 = vmatprep.subr.mxu0 0.0
  %538 = vmatpush1.msra.mxu0 %v50
  %539 = vmatprep.subr.mxu0 0.0
  %540 = vmatpush1.msra.mxu0 0.0
  %541 = vmatprep.subr.mxu0 0.0
  %542 = vmatpush1.msra.mxu0 0.0
  %543 = vmatprep.subr.mxu0 0.0
  %544 = vmatpush1.msra.mxu0 0.0
  %545 = vmatprep.subr.mxu0 0.0
  %546 = vmatpush1.msra.mxu0 0.0
  %547 = vmatprep.subr.mxu0 0.0
  %548 = vmatpush1.msra.mxu0 0.0
  %549 = vmatprep.subr.mxu0 0.0
  %550 = vmatpush1.msra.mxu0 0.0
  %551 = vmatprep.subr.mxu0 0.0
  %552 = vmatpush1.msra.mxu0 0.0
  %553 = vmatprep.subr.mxu0 0.0
  %554 = vmatpush1.msra.mxu0 0.0
  %555 = vmatprep.subr.mxu0 0.0
  %556 = vmatpush1.msra.mxu0 0.0
  %557 = vmatprep.subr.mxu0 0.0
  %558 = vmatpush1.msra.mxu0 0.0
  %559 = vmatprep.subr.mxu0 0.0
  %560 = vmatpush1.msra.mxu0 0.0
  %561 = vmatprep.subr.mxu0 0.0
  %562 = vmatpush1.msra.mxu0 0.0
  %563 = vmatprep.subr.mxu0 0.0
  %564 = vmatpush1.msra.mxu0 0.0
  %565 = vmatprep.subr.mxu0 0.0
  %566 = vmatpush1.msra.mxu0 0.0
  %567 = vmatprep.subr.mxu0 0.0
  %568 = vmatpush1.msra.mxu0 0.0
  %569 = vmatprep.subr.mxu0 0.0
  %570 = vmatpush1.msra.mxu0 0.0
  %571 = vmatprep.subr.mxu0 0.0
  %572 = vmatpush1.msra.mxu0 0.0
  %573 = vmatprep.subr.mxu0 0.0
  %574 = vmatpush1.msra.mxu0 0.0
  %575 = vmatprep.subr.mxu0 0.0
  %576 = vmatpush1.msra.mxu0 0.0
  %577 = vmatprep.subr.mxu0 0.0
  %578 = vmatpush1.msra.mxu0 0.0
  %579 = vmatprep.subr.mxu0 0.0
  %580 = vmatpush1.msra.mxu0 0.0
  %581 = vmatprep.subr.mxu0 0.0
  %582 = vmatpush1.msra.mxu0 0.0
  %583 = vmatprep.subr.mxu0 0.0
  %584 = vmatpush1.msra.mxu0 0.0
  %585 = vmatprep.subr.mxu0 0.0
  %586 = vmatpush1.msra.mxu0 0.0
  %587 = vmatprep.subr.mxu0 0.0
  %588 = vmatpush1.msra.mxu0 0.0
  %589 = vmatprep.subr.mxu0 0.0
  %590 = vmatpush1.msra.mxu0 0.0
  %591 = vmatprep.subr.mxu0 0.0
  %592 = vmatpush1.msra.mxu0 0.0
  %593 = vmatprep.subr.mxu0 0.0
  %594 = vmatpush1.msra.mxu0 0.0
  %595 = vmatprep.mubr.f32.mxu0 0.0
  %596 = vmatmul.mubr.f32.gmra.mrb[0].mxu0 %v529
  %v597 = vpop.f32.mrb[0].mxu0
  %v598 = vadd.f32 0.0, %v597
  %v599 = vpop.f32.mrb[0].mxu0
  %600 = vdwg.mxu0
  %v601 = vadd.f32 %v528, %v598
  %v602 = vxor.u32 %v601, 2147483648
  %v603 = vmul.f32 %v602, 1.442695
  %v604 = vpow.pop %v603
  %v605 = vadd.f32 %v604, 1.0
  %v606 = vrcp.pop %v605
  %v607 = vmul.f32 1.0, %v606
  %v608 = vtanh.pop %v601
  %v609 = vmul.f32 %v607, %v514
  %611 = vrot.lane.b32.xlu0 %v608, 64
  %v612 = vpop.permute.xlu0 %611
  %v614 = vmul.f32 %v607, %v612
  %616 = vrot.lane.b32.xlu0 %v614, 32
  %v617 = vpop.permute.xlu0 %616
  %v619 = vadd.f32 %v609, %v617
  %v620 = vtanh.pop %v619
  %622 = vrot.lane.b32.xlu0 %v620, 64
  %v623 = vpop.permute.xlu0 %622
  %v625 = vmul.f32 %v607, %v623
  %627 = vrot.lane.b32.xlu0 %v625, 32
  %v628 = vpop.permute.xlu0 %627
  %s630 = scalar_lea.vmem [#allocation3], 24
  %631 = vst.msk [vmem:[%s630] sm:$0xff] %vm209, %v628
  %s632 = scalar_lea.vmem [#allocation2], 32
  %v633 = vld [vmem:[%s632] sm:$0xff]
  %v634 = vsel %vm209, %v628, 0
  %636 = vmatprep.subr.mxu0 0.0
  %637 = vmatpush1.msra.mxu0 %v47
  %638 = vmatprep.subr.mxu0 0.0
  %639 = vmatpush1.msra.mxu0 %v48
  %640 = vmatprep.subr.mxu0 0.0
  %641 = vmatpush1.msra.mxu0 %v49
  %642 = vmatprep.subr.mxu0 0.0
  %643 = vmatpush1.msra.mxu0 %v50
  %644 = vmatprep.subr.mxu0 0.0
  %645 = vmatpush1.msra.mxu0 0.0
  %646 = vmatprep.subr.mxu0 0.0
  %647 = vmatpush1.msra.mxu0 0.0
  %648 = vmatprep.subr.mxu0 0.0
  %649 = vmatpush1.msra.mxu0 0.0
  %650 = vmatprep.subr.mxu0 0.0
  %651 = vmatpush1.msra.mxu0 0.0
  %652 = vmatprep.subr.mxu0 0.0
  %653 = vmatpush1.msra.mxu0 0.0
  %654 = vmatprep.subr.mxu0 0.0
  %655 = vmatpush1.msra.mxu0 0.0
  %656 = vmatprep.subr.mxu0 0.0
  %657 = vmatpush1.msra.mxu0 0.0
  %658 = vmatprep.subr.mxu0 0.0
  %659 = vmatpush1.msra.mxu0 0.0
  %660 = vmatprep.subr.mxu0 0.0
  %661 = vmatpush1.msra.mxu0 0.0
  %662 = vmatprep.subr.mxu0 0.0
  %663 = vmatpush1.msra.mxu0 0.0
  %664 = vmatprep.subr.mxu0 0.0
  %665 = vmatpush1.msra.mxu0 0.0
  %666 = vmatprep.subr.mxu0 0.0
  %667 = vmatpush1.msra.mxu0 0.0
  %668 = vmatprep.subr.mxu0 0.0
  %669 = vmatpush1.msra.mxu0 0.0
  %670 = vmatprep.subr.mxu0 0.0
  %671 = vmatpush1.msra.mxu0 0.0
  %672 = vmatprep.subr.mxu0 0.0
  %673 = vmatpush1.msra.mxu0 0.0
  %674 = vmatprep.subr.mxu0 0.0
  %675 = vmatpush1.msra.mxu0 0.0
  %676 = vmatprep.subr.mxu0 0.0
  %677 = vmatpush1.msra.mxu0 0.0
  %678 = vmatprep.subr.mxu0 0.0
  %679 = vmatpush1.msra.mxu0 0.0
  %680 = vmatprep.subr.mxu0 0.0
  %681 = vmatpush1.msra.mxu0 0.0
  %682 = vmatprep.subr.mxu0 0.0
  %683 = vmatpush1.msra.mxu0 0.0
  %684 = vmatprep.subr.mxu0 0.0
  %685 = vmatpush1.msra.mxu0 0.0
  %686 = vmatprep.subr.mxu0 0.0
  %687 = vmatpush1.msra.mxu0 0.0
  %688 = vmatprep.subr.mxu0 0.0
  %689 = vmatpush1.msra.mxu0 0.0
  %690 = vmatprep.subr.mxu0 0.0
  %691 = vmatpush1.msra.mxu0 0.0
  %692 = vmatprep.subr.mxu0 0.0
  %693 = vmatpush1.msra.mxu0 0.0
  %694 = vmatprep.subr.mxu0 0.0
  %695 = vmatpush1.msra.mxu0 0.0
  %696 = vmatprep.subr.mxu0 0.0
  %697 = vmatpush1.msra.mxu0 0.0
  %698 = vmatprep.subr.mxu0 0.0
  %699 = vmatpush1.msra.mxu0 0.0
  %700 = vmatprep.mubr.f32.mxu0 0.0
  %701 = vmatmul.mubr.f32.gmra.mrb[0].mxu0 %v634
  %v702 = vpop.f32.mrb[0].mxu0
  %v703 = vadd.f32 0.0, %v702
  %v704 = vpop.f32.mrb[0].mxu0
  %705 = vdwg.mxu0
  %v706 = vadd.f32 %v633, %v703
  %v707 = vxor.u32 %v706, 2147483648
  %v708 = vmul.f32 %v707, 1.442695
  %v709 = vpow.pop %v708
  %v710 = vadd.f32 %v709, 1.0
  %v711 = vrcp.pop %v710
  %v712 = vmul.f32 1.0, %v711
  %v713 = vtanh.pop %v706
  %v714 = vmul.f32 %v712, %v619
  %716 = vrot.lane.b32.xlu0 %v713, 64
  %v717 = vpop.permute.xlu0 %716
  %v719 = vmul.f32 %v712, %v717
  %721 = vrot.lane.b32.xlu0 %v719, 32
  %v722 = vpop.permute.xlu0 %721
  %v724 = vadd.f32 %v714, %v722
  %v725 = vtanh.pop %v724
  %727 = vrot.lane.b32.xlu0 %v725, 64
  %v728 = vpop.permute.xlu0 %727
  %v730 = vmul.f32 %v712, %v728
  %732 = vrot.lane.b32.xlu0 %v730, 32
  %v733 = vpop.permute.xlu0 %732
  %s735 = scalar_lea.vmem [#allocation3], 32
  %736 = vst.msk [vmem:[%s735] sm:$0xff] %vm209, %v733
  %s737 = scalar_lea.vmem [#allocation2], 40
  %v738 = vld [vmem:[%s737] sm:$0xff]
  %v739 = vsel %vm209, %v733, 0
  %741 = vmatprep.subr.mxu0 0.0
  %742 = vmatpush1.msra.mxu0 %v47
  %743 = vmatprep.subr.mxu0 0.0
  %744 = vmatpush1.msra.mxu0 %v48
  %745 = vmatprep.subr.mxu0 0.0
  %746 = vmatpush1.msra.mxu0 %v49
  %747 = vmatprep.subr.mxu0 0.0
  %748 = vmatpush1.msra.mxu0 %v50
  %749 = vmatprep.subr.mxu0 0.0
  %750 = vmatpush1.msra.mxu0 0.0
  %751 = vmatprep.subr.mxu0 0.0
  %752 = vmatpush1.msra.mxu0 0.0
  %753 = vmatprep.subr.mxu0 0.0
  %754 = vmatpush1.msra.mxu0 0.0
  %755 = vmatprep.subr.mxu0 0.0
  %756 = vmatpush1.msra.mxu0 0.0
  %757 = vmatprep.subr.mxu0 0.0
  %758 = vmatpush1.msra.mxu0 0.0
  %759 = vmatprep.subr.mxu0 0.0
  %760 = vmatpush1.msra.mxu0 0.0
  %761 = vmatprep.subr.mxu0 0.0
  %762 = vmatpush1.msra.mxu0 0.0
  %763 = vmatprep.subr.mxu0 0.0
  %764 = vmatpush1.msra.mxu0 0.0
  %765 = vmatprep.subr.mxu0 0.0
  %766 = vmatpush1.msra.mxu0 0.0
  %767 = vmatprep.subr.mxu0 0.0
  %768 = vmatpush1.msra.mxu0 0.0
  %769 = vmatprep.subr.mxu0 0.0
  %770 = vmatpush1.msra.mxu0 0.0
  %771 = vmatprep.subr.mxu0 0.0
  %772 = vmatpush1.msra.mxu0 0.0
  %773 = vmatprep.subr.mxu0 0.0
  %774 = vmatpush1.msra.mxu0 0.0
  %775 = vmatprep.subr.mxu0 0.0
  %776 = vmatpush1.msra.mxu0 0.0
  %777 = vmatprep.subr.mxu0 0.0
  %778 = vmatpush1.msra.mxu0 0.0
  %779 = vmatprep.subr.mxu0 0.0
  %780 = vmatpush1.msra.mxu0 0.0
  %781 = vmatprep.subr.mxu0 0.0
  %782 = vmatpush1.msra.mxu0 0.0
  %783 = vmatprep.subr.mxu0 0.0
  %784 = vmatpush1.msra.mxu0 0.0
  %785 = vmatprep.subr.mxu0 0.0
  %786 = vmatpush1.msra.mxu0 0.0
  %787 = vmatprep.subr.mxu0 0.0
  %788 = vmatpush1.msra.mxu0 0.0
  %789 = vmatprep.subr.mxu0 0.0
  %790 = vmatpush1.msra.mxu0 0.0
  %791 = vmatprep.subr.mxu0 0.0
  %792 = vmatpush1.msra.mxu0 0.0
  %793 = vmatprep.subr.mxu0 0.0
  %794 = vmatpush1.msra.mxu0 0.0
  %795 = vmatprep.subr.mxu0 0.0
  %796 = vmatpush1.msra.mxu0 0.0
  %797 = vmatprep.subr.mxu0 0.0
  %798 = vmatpush1.msra.mxu0 0.0
  %799 = vmatprep.subr.mxu0 0.0
  %800 = vmatpush1.msra.mxu0 0.0
  %801 = vmatprep.subr.mxu0 0.0
  %802 = vmatpush1.msra.mxu0 0.0
  %803 = vmatprep.subr.mxu0 0.0
  %804 = vmatpush1.msra.mxu0 0.0
  %805 = vmatprep.mubr.f32.mxu0 0.0
  %806 = vmatmul.mubr.f32.gmra.mrb[0].mxu0 %v739
  %v807 = vpop.f32.mrb[0].mxu0
  %v808 = vadd.f32 0.0, %v807
  %v809 = vpop.f32.mrb[0].mxu0
  %810 = vdwg.mxu0
  %v811 = vadd.f32 %v738, %v808
  %v812 = vxor.u32 %v811, 2147483648
  %v813 = vmul.f32 %v812, 1.442695
  %v814 = vpow.pop %v813
  %v815 = vadd.f32 %v814, 1.0
  %v816 = vrcp.pop %v815
  %v817 = vmul.f32 1.0, %v816
  %v818 = vtanh.pop %v811
  %v819 = vmul.f32 %v817, %v724
  %821 = vrot.lane.b32.xlu0 %v818, 64
  %v822 = vpop.permute.xlu0 %821
  %v824 = vmul.f32 %v817, %v822
  %826 = vrot.lane.b32.xlu0 %v824, 32
  %v827 = vpop.permute.xlu0 %826
  %v829 = vadd.f32 %v819, %v827
  %v830 = vtanh.pop %v829
  %832 = vrot.lane.b32.xlu0 %v830, 64
  %v833 = vpop.permute.xlu0 %832
  %v835 = vmul.f32 %v817, %v833
  %837 = vrot.lane.b32.xlu0 %v835, 32
  %v838 = vpop.permute.xlu0 %837
  %s840 = scalar_lea.vmem [#allocation3], 40
  %841 = vst.msk [vmem:[%s840] sm:$0xff] %vm209, %v838
  %s842 = scalar_lea.vmem [#allocation2], 48
  %v843 = vld [vmem:[%s842] sm:$0xff]
  %v844 = vsel %vm209, %v838, 0
  %846 = vmatprep.subr.mxu0 0.0
  %847 = vmatpush1.msra.mxu0 %v47
  %848 = vmatprep.subr.mxu0 0.0
  %849 = vmatpush1.msra.mxu0 %v48
  %850 = vmatprep.subr.mxu0 0.0
  %851 = vmatpush1.msra.mxu0 %v49
  %852 = vmatprep.subr.mxu0 0.0
  %853 = vmatpush1.msra.mxu0 %v50
  %854 = vmatprep.subr.mxu0 0.0
  %855 = vmatpush1.msra.mxu0 0.0
  %856 = vmatprep.subr.mxu0 0.0
  %857 = vmatpush1.msra.mxu0 0.0
  %858 = vmatprep.subr.mxu0 0.0
  %859 = vmatpush1.msra.mxu0 0.0
  %860 = vmatprep.subr.mxu0 0.0
  %861 = vmatpush1.msra.mxu0 0.0
  %862 = vmatprep.subr.mxu0 0.0
  %863 = vmatpush1.msra.mxu0 0.0
  %864 = vmatprep.subr.mxu0 0.0
  %865 = vmatpush1.msra.mxu0 0.0
  %866 = vmatprep.subr.mxu0 0.0
  %867 = vmatpush1.msra.mxu0 0.0
  %868 = vmatprep.subr.mxu0 0.0
  %869 = vmatpush1.msra.mxu0 0.0
  %870 = vmatprep.subr.mxu0 0.0
  %871 = vmatpush1.msra.mxu0 0.0
  %872 = vmatprep.subr.mxu0 0.0
  %873 = vmatpush1.msra.mxu0 0.0
  %874 = vmatprep.subr.mxu0 0.0
  %875 = vmatpush1.msra.mxu0 0.0
  %876 = vmatprep.subr.mxu0 0.0
  %877 = vmatpush1.msra.mxu0 0.0
  %878 = vmatprep.subr.mxu0 0.0
  %879 = vmatpush1.msra.mxu0 0.0
  %880 = vmatprep.subr.mxu0 0.0
  %881 = vmatpush1.msra.mxu0 0.0
  %882 = vmatprep.subr.mxu0 0.0
  %883 = vmatpush1.msra.mxu0 0.0
  %884 = vmatprep.subr.mxu0 0.0
  %885 = vmatpush1.msra.mxu0 0.0
  %886 = vmatprep.subr.mxu0 0.0
  %887 = vmatpush1.msra.mxu0 0.0
  %888 = vmatprep.subr.mxu0 0.0
  %889 = vmatpush1.msra.mxu0 0.0
  %890 = vmatprep.subr.mxu0 0.0
  %891 = vmatpush1.msra.mxu0 0.0
  %892 = vmatprep.subr.mxu0 0.0
  %893 = vmatpush1.msra.mxu0 0.0
  %894 = vmatprep.subr.mxu0 0.0
  %895 = vmatpush1.msra.mxu0 0.0
  %896 = vmatprep.subr.mxu0 0.0
  %897 = vmatpush1.msra.mxu0 0.0
  %898 = vmatprep.subr.mxu0 0.0
  %899 = vmatpush1.msra.mxu0 0.0
  %900 = vmatprep.subr.mxu0 0.0
  %901 = vmatpush1.msra.mxu0 0.0
  %902 = vmatprep.subr.mxu0 0.0
  %903 = vmatpush1.msra.mxu0 0.0
  %904 = vmatprep.subr.mxu0 0.0
  %905 = vmatpush1.msra.mxu0 0.0
  %906 = vmatprep.subr.mxu0 0.0
  %907 = vmatpush1.msra.mxu0 0.0
  %908 = vmatprep.subr.mxu0 0.0
  %909 = vmatpush1.msra.mxu0 0.0
  %910 = vmatprep.mubr.f32.mxu0 0.0
  %911 = vmatmul.mubr.f32.gmra.mrb[0].mxu0 %v844
  %v912 = vpop.f32.mrb[0].mxu0
  %v913 = vadd.f32 0.0, %v912
  %v914 = vpop.f32.mrb[0].mxu0
  %915 = vdwg.mxu0
  %v916 = vadd.f32 %v843, %v913
  %v917 = vxor.u32 %v916, 2147483648
  %v918 = vmul.f32 %v917, 1.442695
  %v919 = vpow.pop %v918
  %v920 = vadd.f32 %v919, 1.0
  %v921 = vrcp.pop %v920
  %v922 = vmul.f32 1.0, %v921
  %v923 = vtanh.pop %v916
  %v924 = vmul.f32 %v922, %v829
  %926 = vrot.lane.b32.xlu0 %v923, 64
  %v927 = vpop.permute.xlu0 %926
  %v929 = vmul.f32 %v922, %v927
  %931 = vrot.lane.b32.xlu0 %v929, 32
  %v932 = vpop.permute.xlu0 %931
  %v934 = vadd.f32 %v924, %v932
  %v935 = vtanh.pop %v934
  %937 = vrot.lane.b32.xlu0 %v935, 64
  %v938 = vpop.permute.xlu0 %937
  %v940 = vmul.f32 %v922, %v938
  %942 = vrot.lane.b32.xlu0 %v940, 32
  %v943 = vpop.permute.xlu0 %942
  %s945 = scalar_lea.vmem [#allocation3], 48
  %946 = vst.msk [vmem:[%s945] sm:$0xff] %vm209, %v943
  %s947 = scalar_lea.vmem [#allocation2], 56
  %v948 = vld [vmem:[%s947] sm:$0xff]
  %v949 = vsel %vm209, %v943, 0
  %951 = vmatprep.subr.mxu0 0.0
  %952 = vmatpush1.msra.mxu0 %v47
  %953 = vmatprep.subr.mxu0 0.0
  %954 = vmatpush1.msra.mxu0 %v48
  %955 = vmatprep.subr.mxu0 0.0
  %956 = vmatpush1.msra.mxu0 %v49
  %957 = vmatprep.subr.mxu0 0.0
  %958 = vmatpush1.msra.mxu0 %v50
  %959 = vmatprep.subr.mxu0 0.0
  %960 = vmatpush1.msra.mxu0 0.0
  %961 = vmatprep.subr.mxu0 0.0
  %962 = vmatpush1.msra.mxu0 0.0
  %963 = vmatprep.subr.mxu0 0.0
  %964 = vmatpush1.msra.mxu0 0.0
  %965 = vmatprep.subr.mxu0 0.0
  %966 = vmatpush1.msra.mxu0 0.0
  %967 = vmatprep.subr.mxu0 0.0
  %968 = vmatpush1.msra.mxu0 0.0
  %969 = vmatprep.subr.mxu0 0.0
  %970 = vmatpush1.msra.mxu0 0.0
  %971 = vmatprep.subr.mxu0 0.0
  %972 = vmatpush1.msra.mxu0 0.0
  %973 = vmatprep.subr.mxu0 0.0
  %974 = vmatpush1.msra.mxu0 0.0
  %975 = vmatprep.subr.mxu0 0.0
  %976 = vmatpush1.msra.mxu0 0.0
  %977 = vmatprep.subr.mxu0 0.0
  %978 = vmatpush1.msra.mxu0 0.0
  %979 = vmatprep.subr.mxu0 0.0
  %980 = vmatpush1.msra.mxu0 0.0
  %981 = vmatprep.subr.mxu0 0.0
  %982 = vmatpush1.msra.mxu0 0.0
  %983 = vmatprep.subr.mxu0 0.0
  %984 = vmatpush1.msra.mxu0 0.0
  %985 = vmatprep.subr.mxu0 0.0
  %986 = vmatpush1.msra.mxu0 0.0
  %987 = vmatprep.subr.mxu0 0.0
  %988 = vmatpush1.msra.mxu0 0.0
  %989 = vmatprep.subr.mxu0 0.0
  %990 = vmatpush1.msra.mxu0 0.0
  %991 = vmatprep.subr.mxu0 0.0
  %992 = vmatpush1.msra.mxu0 0.0
  %993 = vmatprep.subr.mxu0 0.0
  %994 = vmatpush1.msra.mxu0 0.0
  %995 = vmatprep.subr.mxu0 0.0
  %996 = vmatpush1.msra.mxu0 0.0
  %997 = vmatprep.subr.mxu0 0.0
  %998 = vmatpush1.msra.mxu0 0.0
  %999 = vmatprep.subr.mxu0 0.0
  %1000 = vmatpush1.msra.mxu0 0.0
  %1001 = vmatprep.subr.mxu0 0.0
  %1002 = vmatpush1.msra.mxu0 0.0
  %1003 = vmatprep.subr.mxu0 0.0
  %1004 = vmatpush1.msra.mxu0 0.0
  %1005 = vmatprep.subr.mxu0 0.0
  %1006 = vmatpush1.msra.mxu0 0.0
  %1007 = vmatprep.subr.mxu0 0.0
  %1008 = vmatpush1.msra.mxu0 0.0
  %1009 = vmatprep.subr.mxu0 0.0
  %1010 = vmatpush1.msra.mxu0 0.0
  %1011 = vmatprep.subr.mxu0 0.0
  %1012 = vmatpush1.msra.mxu0 0.0
  %1013 = vmatprep.subr.mxu0 0.0
  %1014 = vmatpush1.msra.mxu0 0.0
  %1015 = vmatprep.mubr.f32.mxu0 0.0
  %1016 = vmatmul.mubr.f32.gmra.mrb[0].mxu0 %v949
  %v1017 = vpop.f32.mrb[0].mxu0
  %v1018 = vadd.f32 0.0, %v1017
  %v1019 = vpop.f32.mrb[0].mxu0
  %1020 = vdwg.mxu0
  %v1021 = vadd.f32 %v948, %v1018
  %v1022 = vxor.u32 %v1021, 2147483648
  %v1023 = vmul.f32 %v1022, 1.442695
  %v1024 = vpow.pop %v1023
  %v1025 = vadd.f32 %v1024, 1.0
  %v1026 = vrcp.pop %v1025
  %v1027 = vmul.f32 1.0, %v1026
  %v1028 = vtanh.pop %v1021
  %v1029 = vmul.f32 %v1027, %v934
  %1031 = vrot.lane.b32.xlu0 %v1028, 64
  %v1032 = vpop.permute.xlu0 %1031
  %v1034 = vmul.f32 %v1027, %v1032
  %1036 = vrot.lane.b32.xlu0 %v1034, 32
  %v1037 = vpop.permute.xlu0 %1036
  %v1039 = vadd.f32 %v1029, %v1037
  %v1040 = vtanh.pop %v1039
  %1042 = vrot.lane.b32.xlu0 %v1040, 64
  %v1043 = vpop.permute.xlu0 %1042
  %v1045 = vmul.f32 %v1027, %v1043
  %1047 = vrot.lane.b32.xlu0 %v1045, 32
  %v1048 = vpop.permute.xlu0 %1047
  %s1050 = scalar_lea.vmem [#allocation3], 56
  %1051 = vst.msk [vmem:[%s1050] sm:$0xff] %vm209, %v1048
  %1052 = vst.msk [vmem:[%s14] sm:$0xff] %vm209, %v1048
  %1054 = vrot.lane.b32.xlu0 %v1039, 96
  %v1055 = vpop.permute.xlu0 %1054
  %1057 = vst.msk [vmem:[%s15] sm:$0xff] %vm209, %v1055
  %v1058 = vld [vmem:[%s7] sm:$0xff]
  %v1059 = vld [vmem:[%s7 + $0x8] sm:$0xff]
  %v1060 = vld [vmem:[%s7 + $0x10] sm:$0xff]
  %v1061 = vld [vmem:[%s7 + $0x18] sm:$0xff]
  %v1062 = vld [vmem:[#allocation3] sm:$0xff]
  %v1063 = vld [vmem:[#allocation3 + $0x8] sm:$0xff]
  %v1064 = vld [vmem:[#allocation3 + $0x10] sm:$0xff]
  %v1065 = vld [vmem:[#allocation3 + $0x18] sm:$0xff]
  %v1066 = vld [vmem:[#allocation3 + $0x20] sm:$0xff]
  %v1067 = vld [vmem:[#allocation3 + $0x28] sm:$0xff]
  %v1068 = vld [vmem:[#allocation3 + $0x30] sm:$0xff]
  %v1069 = vld [vmem:[#allocation3 + $0x38] sm:$0xff]
  %v1070 = vld [vmem:[%s6] sm:$0xff]
  %v1071 = vld [vmem:[%s6 + $0x8] sm:$0xff]
  %v1072 = vld [vmem:[%s6 + $0x10] sm:$0xff]
  %v1073 = vld [vmem:[%s6 + $0x18] sm:$0xff]
  %v1074 = vld [vmem:[%s8] sm:$0x1]
  %v1076 = vlaneseq
  %v1077 = vshrl.u32 %v1076, 7
  %v1078 = vsub.s32 0, %v1077
  %v1079 = vrot.slane %v1074, %v1078
  %v1082 = vsel %vm209, %v1062, 0
  %v1085 = vsel %vm209, %v1063, 0
  %v1088 = vsel %vm209, %v1064, 0
  %v1091 = vsel %vm209, %v1065, 0
  %v1094 = vsel %vm209, %v1066, 0
  %v1097 = vsel %vm209, %v1067, 0
  %v1100 = vsel %vm209, %v1068, 0
  %v1103 = vsel %vm209, %v1069, 0
  %1105 = vmatprep.subr.mxu0 0.0
  %1106 = vmatpush1.msra.mxu0 %v1070
  %1107 = vmatprep.subr.mxu0 0.0
  %1108 = vmatpush1.msra.mxu0 %v1071
  %1109 = vmatprep.subr.mxu0 0.0
  %1110 = vmatpush1.msra.mxu0 %v1072
  %1111 = vmatprep.subr.mxu0 0.0
  %1112 = vmatpush1.msra.mxu0 %v1073
  %1113 = vmatprep.subr.mxu0 0.0
  %1114 = vmatpush1.msra.mxu0 0.0
  %1115 = vmatprep.subr.mxu0 0.0
  %1116 = vmatpush1.msra.mxu0 0.0
  %1117 = vmatprep.subr.mxu0 0.0
  %1118 = vmatpush1.msra.mxu0 0.0
  %1119 = vmatprep.subr.mxu0 0.0
  %1120 = vmatpush1.msra.mxu0 0.0
  %1121 = vmatprep.subr.mxu0 0.0
  %1122 = vmatpush1.msra.mxu0 0.0
  %1123 = vmatprep.subr.mxu0 0.0
  %1124 = vmatpush1.msra.mxu0 0.0
  %1125 = vmatprep.subr.mxu0 0.0
  %1126 = vmatpush1.msra.mxu0 0.0
  %1127 = vmatprep.subr.mxu0 0.0
  %1128 = vmatpush1.msra.mxu0 0.0
  %1129 = vmatprep.subr.mxu0 0.0
  %1130 = vmatpush1.msra.mxu0 0.0
  %1131 = vmatprep.subr.mxu0 0.0
  %1132 = vmatpush1.msra.mxu0 0.0
  %1133 = vmatprep.subr.mxu0 0.0
  %1134 = vmatpush1.msra.mxu0 0.0
  %1135 = vmatprep.subr.mxu0 0.0
  %1136 = vmatpush1.msra.mxu0 0.0
  %1137 = vmatprep.subr.mxu0 0.0
  %1138 = vmatpush1.msra.mxu0 0.0
  %1139 = vmatprep.subr.mxu0 0.0
  %1140 = vmatpush1.msra.mxu0 0.0
  %1141 = vmatprep.subr.mxu0 0.0
  %1142 = vmatpush1.msra.mxu0 0.0
  %1143 = vmatprep.subr.mxu0 0.0
  %1144 = vmatpush1.msra.mxu0 0.0
  %1145 = vmatprep.subr.mxu0 0.0
  %1146 = vmatpush1.msra.mxu0 0.0
  %1147 = vmatprep.subr.mxu0 0.0
  %1148 = vmatpush1.msra.mxu0 0.0
  %1149 = vmatprep.subr.mxu0 0.0
  %1150 = vmatpush1.msra.mxu0 0.0
  %1151 = vmatprep.subr.mxu0 0.0
  %1152 = vmatpush1.msra.mxu0 0.0
  %1153 = vmatprep.subr.mxu0 0.0
  %1154 = vmatpush1.msra.mxu0 0.0
  %1155 = vmatprep.subr.mxu0 0.0
  %1156 = vmatpush1.msra.mxu0 0.0
  %1157 = vmatprep.subr.mxu0 0.0
  %1158 = vmatpush1.msra.mxu0 0.0
  %1159 = vmatprep.subr.mxu0 0.0
  %1160 = vmatpush1.msra.mxu0 0.0
  %1161 = vmatprep.subr.mxu0 0.0
  %1162 = vmatpush1.msra.mxu0 0.0
  %1163 = vmatprep.subr.mxu0 0.0
  %1164 = vmatpush1.msra.mxu0 0.0
  %1165 = vmatprep.subr.mxu0 0.0
  %1166 = vmatpush1.msra.mxu0 0.0
  %1167 = vmatprep.subr.mxu0 0.0
  %1168 = vmatpush1.msra.mxu0 0.0
  %1169 = vmatprep.mubr.f32.mxu0 0.0
  %1170 = vmatmul.mubr.f32.gmra.mrb[0].mxu0 %v1082
  %v1171 = vpop.f32.mrb[0].mxu0
  %v1172 = vadd.f32 %v1079, %v1171
  %v1173 = vpop.f32.mrb[0].mxu0
  %1174 = vmatprep.mubr.f32.mxu0 0.0
  %1175 = vmatmul.mubr.f32.gmra.mrb[0].mxu0 %v1085
  %v1176 = vpop.f32.mrb[0].mxu0
  %v1177 = vadd.f32 %v1079, %v1176
  %v1178 = vpop.f32.mrb[0].mxu0
  %1179 = vmatprep.mubr.f32.mxu0 0.0
  %1180 = vmatmul.mubr.f32.gmra.mrb[0].mxu0 %v1088
  %v1181 = vpop.f32.mrb[0].mxu0
  %v1182 = vadd.f32 %v1079, %v1181
  %v1183 = vpop.f32.mrb[0].mxu0
  %1184 = vmatprep.mubr.f32.mxu0 0.0
  %1185 = vmatmul.mubr.f32.gmra.mrb[0].mxu0 %v1091
  %v1186 = vpop.f32.mrb[0].mxu0
  %v1187 = vadd.f32 %v1079, %v1186
  %v1188 = vpop.f32.mrb[0].mxu0
  %1189 = vmatprep.mubr.f32.mxu0 0.0
  %1190 = vmatmul.mubr.f32.gmra.mrb[0].mxu0 %v1094
  %v1191 = vpop.f32.mrb[0].mxu0
  %v1192 = vadd.f32 %v1079, %v1191
  %v1193 = vpop.f32.mrb[0].mxu0
  %1194 = vmatprep.mubr.f32.mxu0 0.0
  %1195 = vmatmul.mubr.f32.gmra.mrb[0].mxu0 %v1097
  %v1196 = vpop.f32.mrb[0].mxu0
  %v1197 = vadd.f32 %v1079, %v1196
  %v1198 = vpop.f32.mrb[0].mxu0
  %1199 = vmatprep.mubr.f32.mxu0 0.0
  %1200 = vmatmul.mubr.f32.gmra.mrb[0].mxu0 %v1100
  %v1201 = vpop.f32.mrb[0].mxu0
  %v1202 = vadd.f32 %v1079, %v1201
  %v1203 = vpop.f32.mrb[0].mxu0
  %1204 = vmatprep.mubr.f32.mxu0 0.0
  %1205 = vmatmul.mubr.f32.gmra.mrb[0].mxu0 %v1103
  %v1206 = vpop.f32.mrb[0].mxu0
  %v1207 = vadd.f32 %v1079, %v1206
  %v1208 = vpop.f32.mrb[0].mxu0
  %1209 = vdwg.mxu0
  %1210 = vst [vmem:[#allocation2] sm:$0xff] %v1172
  %1211 = vst [vmem:[#allocation2 + $0x8] sm:$0xff] %v1177
  %1212 = vst [vmem:[#allocation2 + $0x10] sm:$0xff] %v1182
  %1213 = vst [vmem:[#allocation2 + $0x18] sm:$0xff] %v1187
  %1214 = vst [vmem:[#allocation2 + $0x20] sm:$0xff] %v1192
  %1215 = vst [vmem:[#allocation2 + $0x28] sm:$0xff] %v1197
  %1216 = vst [vmem:[#allocation2 + $0x30] sm:$0xff] %v1202
  %1217 = vst [vmem:[#allocation2 + $0x38] sm:$0xff] %v1207
  %s1218 = scalar_lea.vmem %s1, 8
  %v1219 = vld [vmem:[%s1218] sm:$0xff]
  %s1220 = scalar_lea.vmem %s2, 8
  %v1221 = vld [vmem:[%s1220] sm:$0xff]
  %v1222 = vld [vmem:[#allocation2] sm:$0xff]
  %v1224 = vsel %vm209, %v1219, 0
  %1226 = vmatprep.subr.mxu0 0.0
  %1227 = vmatpush1.msra.mxu0 %v1058
  %1228 = vmatprep.subr.mxu0 0.0
  %1229 = vmatpush1.msra.mxu0 %v1059
  %1230 = vmatprep.subr.mxu0 0.0
  %1231 = vmatpush1.msra.mxu0 %v1060
  %1232 = vmatprep.subr.mxu0 0.0
  %1233 = vmatpush1.msra.mxu0 %v1061
  %1234 = vmatprep.subr.mxu0 0.0
  %1235 = vmatpush1.msra.mxu0 0.0
  %1236 = vmatprep.subr.mxu0 0.0
  %1237 = vmatpush1.msra.mxu0 0.0
  %1238 = vmatprep.subr.mxu0 0.0
  %1239 = vmatpush1.msra.mxu0 0.0
  %1240 = vmatprep.subr.mxu0 0.0
  %1241 = vmatpush1.msra.mxu0 0.0
  %1242 = vmatprep.subr.mxu0 0.0
  %1243 = vmatpush1.msra.mxu0 0.0
  %1244 = vmatprep.subr.mxu0 0.0
  %1245 = vmatpush1.msra.mxu0 0.0
  %1246 = vmatprep.subr.mxu0 0.0
  %1247 = vmatpush1.msra.mxu0 0.0
  %1248 = vmatprep.subr.mxu0 0.0
  %1249 = vmatpush1.msra.mxu0 0.0
  %1250 = vmatprep.subr.mxu0 0.0
  %1251 = vmatpush1.msra.mxu0 0.0
  %1252 = vmatprep.subr.mxu0 0.0
  %1253 = vmatpush1.msra.mxu0 0.0
  %1254 = vmatprep.subr.mxu0 0.0
  %1255 = vmatpush1.msra.mxu0 0.0
  %1256 = vmatprep.subr.mxu0 0.0
  %1257 = vmatpush1.msra.mxu0 0.0
  %1258 = vmatprep.subr.mxu0 0.0
  %1259 = vmatpush1.msra.mxu0 0.0
  %1260 = vmatprep.subr.mxu0 0.0
  %1261 = vmatpush1.msra.mxu0 0.0
  %1262 = vmatprep.subr.mxu0 0.0
  %1263 = vmatpush1.msra.mxu0 0.0
  %1264 = vmatprep.subr.mxu0 0.0
  %1265 = vmatpush1.msra.mxu0 0.0
  %1266 = vmatprep.subr.mxu0 0.0
  %1267 = vmatpush1.msra.mxu0 0.0
  %1268 = vmatprep.subr.mxu0 0.0
  %1269 = vmatpush1.msra.mxu0 0.0
  %1270 = vmatprep.subr.mxu0 0.0
  %1271 = vmatpush1.msra.mxu0 0.0
  %1272 = vmatprep.subr.mxu0 0.0
  %1273 = vmatpush1.msra.mxu0 0.0
  %1274 = vmatprep.subr.mxu0 0.0
  %1275 = vmatpush1.msra.mxu0 0.0
  %1276 = vmatprep.subr.mxu0 0.0
  %1277 = vmatpush1.msra.mxu0 0.0
  %1278 = vmatprep.subr.mxu0 0.0
  %1279 = vmatpush1.msra.mxu0 0.0
  %1280 = vmatprep.subr.mxu0 0.0
  %1281 = vmatpush1.msra.mxu0 0.0
  %1282 = vmatprep.subr.mxu0 0.0
  %1283 = vmatpush1.msra.mxu0 0.0
  %1284 = vmatprep.subr.mxu0 0.0
  %1285 = vmatpush1.msra.mxu0 0.0
  %1286 = vmatprep.subr.mxu0 0.0
  %1287 = vmatpush1.msra.mxu0 0.0
  %1288 = vmatprep.subr.mxu0 0.0
  %1289 = vmatpush1.msra.mxu0 0.0
  %1290 = vmatprep.mubr.f32.mxu0 0.0
  %1291 = vmatmul.mubr.f32.gmra.mrb[0].mxu0 %v1224
  %v1292 = vpop.f32.mrb[0].mxu0
  %v1293 = vadd.f32 0.0, %v1292
  %v1294 = vpop.f32.mrb[0].mxu0
  %1295 = vdwg.mxu0
  %v1296 = vadd.f32 %v1222, %v1293
  %v1297 = vxor.u32 %v1296, 2147483648
  %v1298 = vmul.f32 %v1297, 1.442695
  %v1299 = vpow.pop %v1298
  %v1300 = vadd.f32 %v1299, 1.0
  %v1301 = vrcp.pop %v1300
  %v1302 = vmul.f32 1.0, %v1301
  %v1303 = vtanh.pop %v1296
  %1305 = vrot.lane.b32.xlu0 %v1221, 32
  %v1306 = vpop.permute.xlu0 %1305
  %v1308 = vmul.f32 %v1302, %v1306
  %1310 = vrot.lane.b32.xlu0 %v1303, 64
  %v1311 = vpop.permute.xlu0 %1310
  %v1313 = vmul.f32 %v1302, %v1311
  %1315 = vrot.lane.b32.xlu0 %v1313, 32
  %v1316 = vpop.permute.xlu0 %1315
  %v1318 = vadd.f32 %v1308, %v1316
  %v1319 = vtanh.pop %v1318
  %1321 = vrot.lane.b32.xlu0 %v1319, 64
  %v1322 = vpop.permute.xlu0 %1321
  %v1324 = vmul.f32 %v1302, %v1322
  %v1325 = vld [vmem:[%s317] sm:$0xff]
  %1327 = vrot.lane.b32.xlu0 %v1324, 32
  %v1328 = vpop.permute.xlu0 %1327
  %v1329 = vsel %vm209, %v1328, 0
  %1331 = vmatprep.subr.mxu0 0.0
  %1332 = vmatpush1.msra.mxu0 %v1058
  %1333 = vmatprep.subr.mxu0 0.0
  %1334 = vmatpush1.msra.mxu0 %v1059
  %1335 = vmatprep.subr.mxu0 0.0
  %1336 = vmatpush1.msra.mxu0 %v1060
  %1337 = vmatprep.subr.mxu0 0.0
  %1338 = vmatpush1.msra.mxu0 %v1061
  %1339 = vmatprep.subr.mxu0 0.0
  %1340 = vmatpush1.msra.mxu0 0.0
  %1341 = vmatprep.subr.mxu0 0.0
  %1342 = vmatpush1.msra.mxu0 0.0
  %1343 = vmatprep.subr.mxu0 0.0
  %1344 = vmatpush1.msra.mxu0 0.0
  %1345 = vmatprep.subr.mxu0 0.0
  %1346 = vmatpush1.msra.mxu0 0.0
  %1347 = vmatprep.subr.mxu0 0.0
  %1348 = vmatpush1.msra.mxu0 0.0
  %1349 = vmatprep.subr.mxu0 0.0
  %1350 = vmatpush1.msra.mxu0 0.0
  %1351 = vmatprep.subr.mxu0 0.0
  %1352 = vmatpush1.msra.mxu0 0.0
  %1353 = vmatprep.subr.mxu0 0.0
  %1354 = vmatpush1.msra.mxu0 0.0
  %1355 = vmatprep.subr.mxu0 0.0
  %1356 = vmatpush1.msra.mxu0 0.0
  %1357 = vmatprep.subr.mxu0 0.0
  %1358 = vmatpush1.msra.mxu0 0.0
  %1359 = vmatprep.subr.mxu0 0.0
  %1360 = vmatpush1.msra.mxu0 0.0
  %1361 = vmatprep.subr.mxu0 0.0
  %1362 = vmatpush1.msra.mxu0 0.0
  %1363 = vmatprep.subr.mxu0 0.0
  %1364 = vmatpush1.msra.mxu0 0.0
  %1365 = vmatprep.subr.mxu0 0.0
  %1366 = vmatpush1.msra.mxu0 0.0
  %1367 = vmatprep.subr.mxu0 0.0
  %1368 = vmatpush1.msra.mxu0 0.0
  %1369 = vmatprep.subr.mxu0 0.0
  %1370 = vmatpush1.msra.mxu0 0.0
  %1371 = vmatprep.subr.mxu0 0.0
  %1372 = vmatpush1.msra.mxu0 0.0
  %1373 = vmatprep.subr.mxu0 0.0
  %1374 = vmatpush1.msra.mxu0 0.0
  %1375 = vmatprep.subr.mxu0 0.0
  %1376 = vmatpush1.msra.mxu0 0.0
  %1377 = vmatprep.subr.mxu0 0.0
  %1378 = vmatpush1.msra.mxu0 0.0
  %1379 = vmatprep.subr.mxu0 0.0
  %1380 = vmatpush1.msra.mxu0 0.0
  %1381 = vmatprep.subr.mxu0 0.0
  %1382 = vmatpush1.msra.mxu0 0.0
  %1383 = vmatprep.subr.mxu0 0.0
  %1384 = vmatpush1.msra.mxu0 0.0
  %1385 = vmatprep.subr.mxu0 0.0
  %1386 = vmatpush1.msra.mxu0 0.0
  %1387 = vmatprep.subr.mxu0 0.0
  %1388 = vmatpush1.msra.mxu0 0.0
  %1389 = vmatprep.subr.mxu0 0.0
  %1390 = vmatpush1.msra.mxu0 0.0
  %1391 = vmatprep.subr.mxu0 0.0
  %1392 = vmatpush1.msra.mxu0 0.0
  %1393 = vmatprep.subr.mxu0 0.0
  %1394 = vmatpush1.msra.mxu0 0.0
  %1395 = vmatprep.mubr.f32.mxu0 0.0
  %1396 = vmatmul.mubr.f32.gmra.mrb[0].mxu0 %v1329
  %v1397 = vpop.f32.mrb[0].mxu0
  %v1398 = vadd.f32 0.0, %v1397
  %v1399 = vpop.f32.mrb[0].mxu0
  %1400 = vdwg.mxu0
  %v1401 = vadd.f32 %v1325, %v1398
  %v1402 = vxor.u32 %v1401, 2147483648
  %v1403 = vmul.f32 %v1402, 1.442695
  %v1404 = vpow.pop %v1403
  %v1405 = vadd.f32 %v1404, 1.0
  %v1406 = vrcp.pop %v1405
  %v1407 = vmul.f32 1.0, %v1406
  %v1408 = vtanh.pop %v1401
  %v1409 = vmul.f32 %v1407, %v1318
  %1411 = vrot.lane.b32.xlu0 %v1408, 64
  %v1412 = vpop.permute.xlu0 %1411
  %v1414 = vmul.f32 %v1407, %v1412
  %1416 = vrot.lane.b32.xlu0 %v1414, 32
  %v1417 = vpop.permute.xlu0 %1416
  %v1419 = vadd.f32 %v1409, %v1417
  %v1420 = vtanh.pop %v1419
  %1422 = vrot.lane.b32.xlu0 %v1420, 64
  %v1423 = vpop.permute.xlu0 %1422
  %v1425 = vmul.f32 %v1407, %v1423
  %v1426 = vld [vmem:[%s422] sm:$0xff]
  %1428 = vrot.lane.b32.xlu0 %v1425, 32
  %v1429 = vpop.permute.xlu0 %1428
  %v1430 = vsel %vm209, %v1429, 0
  %1432 = vmatprep.subr.mxu0 0.0
  %1433 = vmatpush1.msra.mxu0 %v1058
  %1434 = vmatprep.subr.mxu0 0.0
  %1435 = vmatpush1.msra.mxu0 %v1059
  %1436 = vmatprep.subr.mxu0 0.0
  %1437 = vmatpush1.msra.mxu0 %v1060
  %1438 = vmatprep.subr.mxu0 0.0
  %1439 = vmatpush1.msra.mxu0 %v1061
  %1440 = vmatprep.subr.mxu0 0.0
  %1441 = vmatpush1.msra.mxu0 0.0
  %1442 = vmatprep.subr.mxu0 0.0
  %1443 = vmatpush1.msra.mxu0 0.0
  %1444 = vmatprep.subr.mxu0 0.0
  %1445 = vmatpush1.msra.mxu0 0.0
  %1446 = vmatprep.subr.mxu0 0.0
  %1447 = vmatpush1.msra.mxu0 0.0
  %1448 = vmatprep.subr.mxu0 0.0
  %1449 = vmatpush1.msra.mxu0 0.0
  %1450 = vmatprep.subr.mxu0 0.0
  %1451 = vmatpush1.msra.mxu0 0.0
  %1452 = vmatprep.subr.mxu0 0.0
  %1453 = vmatpush1.msra.mxu0 0.0
  %1454 = vmatprep.subr.mxu0 0.0
  %1455 = vmatpush1.msra.mxu0 0.0
  %1456 = vmatprep.subr.mxu0 0.0
  %1457 = vmatpush1.msra.mxu0 0.0
  %1458 = vmatprep.subr.mxu0 0.0
  %1459 = vmatpush1.msra.mxu0 0.0
  %1460 = vmatprep.subr.mxu0 0.0
  %1461 = vmatpush1.msra.mxu0 0.0
  %1462 = vmatprep.subr.mxu0 0.0
  %1463 = vmatpush1.msra.mxu0 0.0
  %1464 = vmatprep.subr.mxu0 0.0
  %1465 = vmatpush1.msra.mxu0 0.0
  %1466 = vmatprep.subr.mxu0 0.0
  %1467 = vmatpush1.msra.mxu0 0.0
  %1468 = vmatprep.subr.mxu0 0.0
  %1469 = vmatpush1.msra.mxu0 0.0
  %1470 = vmatprep.subr.mxu0 0.0
  %1471 = vmatpush1.msra.mxu0 0.0
  %1472 = vmatprep.subr.mxu0 0.0
  %1473 = vmatpush1.msra.mxu0 0.0
  %1474 = vmatprep.subr.mxu0 0.0
  %1475 = vmatpush1.msra.mxu0 0.0
  %1476 = vmatprep.subr.mxu0 0.0
  %1477 = vmatpush1.msra.mxu0 0.0
  %1478 = vmatprep.subr.mxu0 0.0
  %1479 = vmatpush1.msra.mxu0 0.0
  %1480 = vmatprep.subr.mxu0 0.0
  %1481 = vmatpush1.msra.mxu0 0.0
  %1482 = vmatprep.subr.mxu0 0.0
  %1483 = vmatpush1.msra.mxu0 0.0
  %1484 = vmatprep.subr.mxu0 0.0
  %1485 = vmatpush1.msra.mxu0 0.0
  %1486 = vmatprep.subr.mxu0 0.0
  %1487 = vmatpush1.msra.mxu0 0.0
  %1488 = vmatprep.subr.mxu0 0.0
  %1489 = vmatpush1.msra.mxu0 0.0
  %1490 = vmatprep.subr.mxu0 0.0
  %1491 = vmatpush1.msra.mxu0 0.0
  %1492 = vmatprep.subr.mxu0 0.0
  %1493 = vmatpush1.msra.mxu0 0.0
  %1494 = vmatprep.subr.mxu0 0.0
  %1495 = vmatpush1.msra.mxu0 0.0
  %1496 = vmatprep.mubr.f32.mxu0 0.0
  %1497 = vmatmul.mubr.f32.gmra.mrb[0].mxu0 %v1430
  %v1498 = vpop.f32.mrb[0].mxu0
  %v1499 = vadd.f32 0.0, %v1498
  %v1500 = vpop.f32.mrb[0].mxu0
  %1501 = vdwg.mxu0
  %v1502 = vadd.f32 %v1426, %v1499
  %v1503 = vxor.u32 %v1502, 2147483648
  %v1504 = vmul.f32 %v1503, 1.442695
  %v1505 = vpow.pop %v1504
  %v1506 = vadd.f32 %v1505, 1.0
  %v1507 = vrcp.pop %v1506
  %v1508 = vmul.f32 1.0, %v1507
  %v1509 = vtanh.pop %v1502
  %v1510 = vmul.f32 %v1508, %v1419
  %1512 = vrot.lane.b32.xlu0 %v1509, 64
  %v1513 = vpop.permute.xlu0 %1512
  %v1515 = vmul.f32 %v1508, %v1513
  %1517 = vrot.lane.b32.xlu0 %v1515, 32
  %v1518 = vpop.permute.xlu0 %1517
  %v1520 = vadd.f32 %v1510, %v1518
  %v1521 = vtanh.pop %v1520
  %1523 = vrot.lane.b32.xlu0 %v1521, 64
  %v1524 = vpop.permute.xlu0 %1523
  %v1526 = vmul.f32 %v1508, %v1524
  %v1527 = vld [vmem:[%s527] sm:$0xff]
  %1529 = vrot.lane.b32.xlu0 %v1526, 32
  %v1530 = vpop.permute.xlu0 %1529
  %v1531 = vsel %vm209, %v1530, 0
  %1533 = vmatprep.subr.mxu0 0.0
  %1534 = vmatpush1.msra.mxu0 %v1058
  %1535 = vmatprep.subr.mxu0 0.0
  %1536 = vmatpush1.msra.mxu0 %v1059
  %1537 = vmatprep.subr.mxu0 0.0
  %1538 = vmatpush1.msra.mxu0 %v1060
  %1539 = vmatprep.subr.mxu0 0.0
  %1540 = vmatpush1.msra.mxu0 %v1061
  %1541 = vmatprep.subr.mxu0 0.0
  %1542 = vmatpush1.msra.mxu0 0.0
  %1543 = vmatprep.subr.mxu0 0.0
  %1544 = vmatpush1.msra.mxu0 0.0
  %1545 = vmatprep.subr.mxu0 0.0
  %1546 = vmatpush1.msra.mxu0 0.0
  %1547 = vmatprep.subr.mxu0 0.0
  %1548 = vmatpush1.msra.mxu0 0.0
  %1549 = vmatprep.subr.mxu0 0.0
  %1550 = vmatpush1.msra.mxu0 0.0
  %1551 = vmatprep.subr.mxu0 0.0
  %1552 = vmatpush1.msra.mxu0 0.0
  %1553 = vmatprep.subr.mxu0 0.0
  %1554 = vmatpush1.msra.mxu0 0.0
  %1555 = vmatprep.subr.mxu0 0.0
  %1556 = vmatpush1.msra.mxu0 0.0
  %1557 = vmatprep.subr.mxu0 0.0
  %1558 = vmatpush1.msra.mxu0 0.0
  %1559 = vmatprep.subr.mxu0 0.0
  %1560 = vmatpush1.msra.mxu0 0.0
  %1561 = vmatprep.subr.mxu0 0.0
  %1562 = vmatpush1.msra.mxu0 0.0
  %1563 = vmatprep.subr.mxu0 0.0
  %1564 = vmatpush1.msra.mxu0 0.0
  %1565 = vmatprep.subr.mxu0 0.0
  %1566 = vmatpush1.msra.mxu0 0.0
  %1567 = vmatprep.subr.mxu0 0.0
  %1568 = vmatpush1.msra.mxu0 0.0
  %1569 = vmatprep.subr.mxu0 0.0
  %1570 = vmatpush1.msra.mxu0 0.0
  %1571 = vmatprep.subr.mxu0 0.0
  %1572 = vmatpush1.msra.mxu0 0.0
  %1573 = vmatprep.subr.mxu0 0.0
  %1574 = vmatpush1.msra.mxu0 0.0
  %1575 = vmatprep.subr.mxu0 0.0
  %1576 = vmatpush1.msra.mxu0 0.0
  %1577 = vmatprep.subr.mxu0 0.0
  %1578 = vmatpush1.msra.mxu0 0.0
  %1579 = vmatprep.subr.mxu0 0.0
  %1580 = vmatpush1.msra.mxu0 0.0
  %1581 = vmatprep.subr.mxu0 0.0
  %1582 = vmatpush1.msra.mxu0 0.0
  %1583 = vmatprep.subr.mxu0 0.0
  %1584 = vmatpush1.msra.mxu0 0.0
  %1585 = vmatprep.subr.mxu0 0.0
  %1586 = vmatpush1.msra.mxu0 0.0
  %1587 = vmatprep.subr.mxu0 0.0
  %1588 = vmatpush1.msra.mxu0 0.0
  %1589 = vmatprep.subr.mxu0 0.0
  %1590 = vmatpush1.msra.mxu0 0.0
  %1591 = vmatprep.subr.mxu0 0.0
  %1592 = vmatpush1.msra.mxu0 0.0
  %1593 = vmatprep.subr.mxu0 0.0
  %1594 = vmatpush1.msra.mxu0 0.0
  %1595 = vmatprep.subr.mxu0 0.0
  %1596 = vmatpush1.msra.mxu0 0.0
  %1597 = vmatprep.mubr.f32.mxu0 0.0
  %1598 = vmatmul.mubr.f32.gmra.mrb[0].mxu0 %v1531
  %v1599 = vpop.f32.mrb[0].mxu0
  %v1600 = vadd.f32 0.0, %v1599
  %v1601 = vpop.f32.mrb[0].mxu0
  %1602 = vdwg.mxu0
  %v1603 = vadd.f32 %v1527, %v1600
  %v1604 = vxor.u32 %v1603, 2147483648
  %v1605 = vmul.f32 %v1604, 1.442695
  %v1606 = vpow.pop %v1605
  %v1607 = vadd.f32 %v1606, 1.0
  %v1608 = vrcp.pop %v1607
  %v1609 = vmul.f32 1.0, %v1608
  %v1610 = vtanh.pop %v1603
  %v1611 = vmul.f32 %v1609, %v1520
  %1613 = vrot.lane.b32.xlu0 %v1610, 64
  %v1614 = vpop.permute.xlu0 %1613
  %v1616 = vmul.f32 %v1609, %v1614
  %1618 = vrot.lane.b32.xlu0 %v1616, 32
  %v1619 = vpop.permute.xlu0 %1618
  %v1621 = vadd.f32 %v1611, %v1619
  %v1622 = vtanh.pop %v1621
  %1624 = vrot.lane.b32.xlu0 %v1622, 64
  %v1625 = vpop.permute.xlu0 %1624
  %v1627 = vmul.f32 %v1609, %v1625
  %v1628 = vld [vmem:[%s632] sm:$0xff]
  %1630 = vrot.lane.b32.xlu0 %v1627, 32
  %v1631 = vpop.permute.xlu0 %1630
  %v1632 = vsel %vm209, %v1631, 0
  %1634 = vmatprep.subr.mxu0 0.0
  %1635 = vmatpush1.msra.mxu0 %v1058
  %1636 = vmatprep.subr.mxu0 0.0
  %1637 = vmatpush1.msra.mxu0 %v1059
  %1638 = vmatprep.subr.mxu0 0.0
  %1639 = vmatpush1.msra.mxu0 %v1060
  %1640 = vmatprep.subr.mxu0 0.0
  %1641 = vmatpush1.msra.mxu0 %v1061
  %1642 = vmatprep.subr.mxu0 0.0
  %1643 = vmatpush1.msra.mxu0 0.0
  %1644 = vmatprep.subr.mxu0 0.0
  %1645 = vmatpush1.msra.mxu0 0.0
  %1646 = vmatprep.subr.mxu0 0.0
  %1647 = vmatpush1.msra.mxu0 0.0
  %1648 = vmatprep.subr.mxu0 0.0
  %1649 = vmatpush1.msra.mxu0 0.0
  %1650 = vmatprep.subr.mxu0 0.0
  %1651 = vmatpush1.msra.mxu0 0.0
  %1652 = vmatprep.subr.mxu0 0.0
  %1653 = vmatpush1.msra.mxu0 0.0
  %1654 = vmatprep.subr.mxu0 0.0
  %1655 = vmatpush1.msra.mxu0 0.0
  %1656 = vmatprep.subr.mxu0 0.0
  %1657 = vmatpush1.msra.mxu0 0.0
  %1658 = vmatprep.subr.mxu0 0.0
  %1659 = vmatpush1.msra.mxu0 0.0
  %1660 = vmatprep.subr.mxu0 0.0
  %1661 = vmatpush1.msra.mxu0 0.0
  %1662 = vmatprep.subr.mxu0 0.0
  %1663 = vmatpush1.msra.mxu0 0.0
  %1664 = vmatprep.subr.mxu0 0.0
  %1665 = vmatpush1.msra.mxu0 0.0
  %1666 = vmatprep.subr.mxu0 0.0
  %1667 = vmatpush1.msra.mxu0 0.0
  %1668 = vmatprep.subr.mxu0 0.0
  %1669 = vmatpush1.msra.mxu0 0.0
  %1670 = vmatprep.subr.mxu0 0.0
  %1671 = vmatpush1.msra.mxu0 0.0
  %1672 = vmatprep.subr.mxu0 0.0
  %1673 = vmatpush1.msra.mxu0 0.0
  %1674 = vmatprep.subr.mxu0 0.0
  %1675 = vmatpush1.msra.mxu0 0.0
  %1676 = vmatprep.subr.mxu0 0.0
  %1677 = vmatpush1.msra.mxu0 0.0
  %1678 = vmatprep.subr.mxu0 0.0
  %1679 = vmatpush1.msra.mxu0 0.0
  %1680 = vmatprep.subr.mxu0 0.0
  %1681 = vmatpush1.msra.mxu0 0.0
  %1682 = vmatprep.subr.mxu0 0.0
  %1683 = vmatpush1.msra.mxu0 0.0
  %1684 = vmatprep.subr.mxu0 0.0
  %1685 = vmatpush1.msra.mxu0 0.0
  %1686 = vmatprep.subr.mxu0 0.0
  %1687 = vmatpush1.msra.mxu0 0.0
  %1688 = vmatprep.subr.mxu0 0.0
  %1689 = vmatpush1.msra.mxu0 0.0
  %1690 = vmatprep.subr.mxu0 0.0
  %1691 = vmatpush1.msra.mxu0 0.0
  %1692 = vmatprep.subr.mxu0 0.0
  %1693 = vmatpush1.msra.mxu0 0.0
  %1694 = vmatprep.subr.mxu0 0.0
  %1695 = vmatpush1.msra.mxu0 0.0
  %1696 = vmatprep.subr.mxu0 0.0
  %1697 = vmatpush1.msra.mxu0 0.0
  %1698 = vmatprep.mubr.f32.mxu0 0.0
  %1699 = vmatmul.mubr.f32.gmra.mrb[0].mxu0 %v1632
  %v1700 = vpop.f32.mrb[0].mxu0
  %v1701 = vadd.f32 0.0, %v1700
  %v1702 = vpop.f32.mrb[0].mxu0
  %1703 = vdwg.mxu0
  %v1704 = vadd.f32 %v1628, %v1701
  %v1705 = vxor.u32 %v1704, 2147483648
  %v1706 = vmul.f32 %v1705, 1.442695
  %v1707 = vpow.pop %v1706
  %v1708 = vadd.f32 %v1707, 1.0
  %v1709 = vrcp.pop %v1708
  %v1710 = vmul.f32 1.0, %v1709
  %v1711 = vtanh.pop %v1704
  %v1712 = vmul.f32 %v1710, %v1621
  %1714 = vrot.lane.b32.xlu0 %v1711, 64
  %v1715 = vpop.permute.xlu0 %1714
  %v1717 = vmul.f32 %v1710, %v1715
  %1719 = vrot.lane.b32.xlu0 %v1717, 32
  %v1720 = vpop.permute.xlu0 %1719
  %v1722 = vadd.f32 %v1712, %v1720
  %v1723 = vtanh.pop %v1722
  %1725 = vrot.lane.b32.xlu0 %v1723, 64
  %v1726 = vpop.permute.xlu0 %1725
  %v1728 = vmul.f32 %v1710, %v1726
  %v1729 = vld [vmem:[%s737] sm:$0xff]
  %1731 = vrot.lane.b32.xlu0 %v1728, 32
  %v1732 = vpop.permute.xlu0 %1731
  %v1733 = vsel %vm209, %v1732, 0
  %1735 = vmatprep.subr.mxu0 0.0
  %1736 = vmatpush1.msra.mxu0 %v1058
  %1737 = vmatprep.subr.mxu0 0.0
  %1738 = vmatpush1.msra.mxu0 %v1059
  %1739 = vmatprep.subr.mxu0 0.0
  %1740 = vmatpush1.msra.mxu0 %v1060
  %1741 = vmatprep.subr.mxu0 0.0
  %1742 = vmatpush1.msra.mxu0 %v1061
  %1743 = vmatprep.subr.mxu0 0.0
  %1744 = vmatpush1.msra.mxu0 0.0
  %1745 = vmatprep.subr.mxu0 0.0
  %1746 = vmatpush1.msra.mxu0 0.0
  %1747 = vmatprep.subr.mxu0 0.0
  %1748 = vmatpush1.msra.mxu0 0.0
  %1749 = vmatprep.subr.mxu0 0.0
  %1750 = vmatpush1.msra.mxu0 0.0
  %1751 = vmatprep.subr.mxu0 0.0
  %1752 = vmatpush1.msra.mxu0 0.0
  %1753 = vmatprep.subr.mxu0 0.0
  %1754 = vmatpush1.msra.mxu0 0.0
  %1755 = vmatprep.subr.mxu0 0.0
  %1756 = vmatpush1.msra.mxu0 0.0
  %1757 = vmatprep.subr.mxu0 0.0
  %1758 = vmatpush1.msra.mxu0 0.0
  %1759 = vmatprep.subr.mxu0 0.0
  %1760 = vmatpush1.msra.mxu0 0.0
  %1761 = vmatprep.subr.mxu0 0.0
  %1762 = vmatpush1.msra.mxu0 0.0
  %1763 = vmatprep.subr.mxu0 0.0
  %1764 = vmatpush1.msra.mxu0 0.0
  %1765 = vmatprep.subr.mxu0 0.0
  %1766 = vmatpush1.msra.mxu0 0.0
  %1767 = vmatprep.subr.mxu0 0.0
  %1768 = vmatpush1.msra.mxu0 0.0
  %1769 = vmatprep.subr.mxu0 0.0
  %1770 = vmatpush1.msra.mxu0 0.0
  %1771 = vmatprep.subr.mxu0 0.0
  %1772 = vmatpush1.msra.mxu0 0.0
  %1773 = vmatprep.subr.mxu0 0.0
  %1774 = vmatpush1.msra.mxu0 0.0
  %1775 = vmatprep.subr.mxu0 0.0
  %1776 = vmatpush1.msra.mxu0 0.0
  %1777 = vmatprep.subr.mxu0 0.0
  %1778 = vmatpush1.msra.mxu0 0.0
  %1779 = vmatprep.subr.mxu0 0.0
  %1780 = vmatpush1.msra.mxu0 0.0
  %1781 = vmatprep.subr.mxu0 0.0
  %1782 = vmatpush1.msra.mxu0 0.0
  %1783 = vmatprep.subr.mxu0 0.0
  %1784 = vmatpush1.msra.mxu0 0.0
  %1785 = vmatprep.subr.mxu0 0.0
  %1786 = vmatpush1.msra.mxu0 0.0
  %1787 = vmatprep.subr.mxu0 0.0
  %1788 = vmatpush1.msra.mxu0 0.0
  %1789 = vmatprep.subr.mxu0 0.0
  %1790 = vmatpush1.msra.mxu0 0.0
  %1791 = vmatprep.subr.mxu0 0.0
  %1792 = vmatpush1.msra.mxu0 0.0
  %1793 = vmatprep.subr.mxu0 0.0
  %1794 = vmatpush1.msra.mxu0 0.0
  %1795 = vmatprep.subr.mxu0 0.0
  %1796 = vmatpush1.msra.mxu0 0.0
  %1797 = vmatprep.subr.mxu0 0.0
  %1798 = vmatpush1.msra.mxu0 0.0
  %1799 = vmatprep.mubr.f32.mxu0 0.0
  %1800 = vmatmul.mubr.f32.gmra.mrb[0].mxu0 %v1733
  %v1801 = vpop.f32.mrb[0].mxu0
  %v1802 = vadd.f32 0.0, %v1801
  %v1803 = vpop.f32.mrb[0].mxu0
  %1804 = vdwg.mxu0
  %v1805 = vadd.f32 %v1729, %v1802
  %v1806 = vxor.u32 %v1805, 2147483648
  %v1807 = vmul.f32 %v1806, 1.442695
  %v1808 = vpow.pop %v1807
  %v1809 = vadd.f32 %v1808, 1.0
  %v1810 = vrcp.pop %v1809
  %v1811 = vmul.f32 1.0, %v1810
  %v1812 = vtanh.pop %v1805
  %v1813 = vmul.f32 %v1811, %v1722
  %1815 = vrot.lane.b32.xlu0 %v1812, 64
  %v1816 = vpop.permute.xlu0 %1815
  %v1818 = vmul.f32 %v1811, %v1816
  %1820 = vrot.lane.b32.xlu0 %v1818, 32
  %v1821 = vpop.permute.xlu0 %1820
  %v1823 = vadd.f32 %v1813, %v1821
  %v1824 = vtanh.pop %v1823
  %1826 = vrot.lane.b32.xlu0 %v1824, 64
  %v1827 = vpop.permute.xlu0 %1826
  %v1829 = vmul.f32 %v1811, %v1827
  %v1830 = vld [vmem:[%s842] sm:$0xff]
  %1832 = vrot.lane.b32.xlu0 %v1829, 32
  %v1833 = vpop.permute.xlu0 %1832
  %v1834 = vsel %vm209, %v1833, 0
  %1836 = vmatprep.subr.mxu0 0.0
  %1837 = vmatpush1.msra.mxu0 %v1058
  %1838 = vmatprep.subr.mxu0 0.0
  %1839 = vmatpush1.msra.mxu0 %v1059
  %1840 = vmatprep.subr.mxu0 0.0
  %1841 = vmatpush1.msra.mxu0 %v1060
  %1842 = vmatprep.subr.mxu0 0.0
  %1843 = vmatpush1.msra.mxu0 %v1061
  %1844 = vmatprep.subr.mxu0 0.0
  %1845 = vmatpush1.msra.mxu0 0.0
  %1846 = vmatprep.subr.mxu0 0.0
  %1847 = vmatpush1.msra.mxu0 0.0
  %1848 = vmatprep.subr.mxu0 0.0
  %1849 = vmatpush1.msra.mxu0 0.0
  %1850 = vmatprep.subr.mxu0 0.0
  %1851 = vmatpush1.msra.mxu0 0.0
  %1852 = vmatprep.subr.mxu0 0.0
  %1853 = vmatpush1.msra.mxu0 0.0
  %1854 = vmatprep.subr.mxu0 0.0
  %1855 = vmatpush1.msra.mxu0 0.0
  %1856 = vmatprep.subr.mxu0 0.0
  %1857 = vmatpush1.msra.mxu0 0.0
  %1858 = vmatprep.subr.mxu0 0.0
  %1859 = vmatpush1.msra.mxu0 0.0
  %1860 = vmatprep.subr.mxu0 0.0
  %1861 = vmatpush1.msra.mxu0 0.0
  %1862 = vmatprep.subr.mxu0 0.0
  %1863 = vmatpush1.msra.mxu0 0.0
  %1864 = vmatprep.subr.mxu0 0.0
  %1865 = vmatpush1.msra.mxu0 0.0
  %1866 = vmatprep.subr.mxu0 0.0
  %1867 = vmatpush1.msra.mxu0 0.0
  %1868 = vmatprep.subr.mxu0 0.0
  %1869 = vmatpush1.msra.mxu0 0.0
  %1870 = vmatprep.subr.mxu0 0.0
  %1871 = vmatpush1.msra.mxu0 0.0
  %1872 = vmatprep.subr.mxu0 0.0
  %1873 = vmatpush1.msra.mxu0 0.0
  %1874 = vmatprep.subr.mxu0 0.0
  %1875 = vmatpush1.msra.mxu0 0.0
  %1876 = vmatprep.subr.mxu0 0.0
  %1877 = vmatpush1.msra.mxu0 0.0
  %1878 = vmatprep.subr.mxu0 0.0
  %1879 = vmatpush1.msra.mxu0 0.0
  %1880 = vmatprep.subr.mxu0 0.0
  %1881 = vmatpush1.msra.mxu0 0.0
  %1882 = vmatprep.subr.mxu0 0.0
  %1883 = vmatpush1.msra.mxu0 0.0
  %1884 = vmatprep.subr.mxu0 0.0
  %1885 = vmatpush1.msra.mxu0 0.0
  %1886 = vmatprep.subr.mxu0 0.0
  %1887 = vmatpush1.msra.mxu0 0.0
  %1888 = vmatprep.subr.mxu0 0.0
  %1889 = vmatpush1.msra.mxu0 0.0
  %1890 = vmatprep.subr.mxu0 0.0
  %1891 = vmatpush1.msra.mxu0 0.0
  %1892 = vmatprep.subr.mxu0 0.0
  %1893 = vmatpush1.msra.mxu0 0.0
  %1894 = vmatprep.subr.mxu0 0.0
  %1895 = vmatpush1.msra.mxu0 0.0
  %1896 = vmatprep.subr.mxu0 0.0
  %1897 = vmatpush1.msra.mxu0 0.0
  %1898 = vmatprep.subr.mxu0 0.0
  %1899 = vmatpush1.msra.mxu0 0.0
  %1900 = vmatprep.mubr.f32.mxu0 0.0
  %1901 = vmatmul.mubr.f32.gmra.mrb[0].mxu0 %v1834
  %v1902 = vpop.f32.mrb[0].mxu0
  %v1903 = vadd.f32 0.0, %v1902
  %v1904 = vpop.f32.mrb[0].mxu0
  %1905 = vdwg.mxu0
  %v1906 = vadd.f32 %v1830, %v1903
  %v1907 = vxor.u32 %v1906, 2147483648
  %v1908 = vmul.f32 %v1907, 1.442695
  %v1909 = vpow.pop %v1908
  %v1910 = vadd.f32 %v1909, 1.0
  %v1911 = vrcp.pop %v1910
  %v1912 = vmul.f32 1.0, %v1911
  %v1913 = vtanh.pop %v1906
  %v1914 = vmul.f32 %v1912, %v1823
  %1916 = vrot.lane.b32.xlu0 %v1913, 64
  %v1917 = vpop.permute.xlu0 %1916
  %v1919 = vmul.f32 %v1912, %v1917
  %1921 = vrot.lane.b32.xlu0 %v1919, 32
  %v1922 = vpop.permute.xlu0 %1921
  %v1924 = vadd.f32 %v1914, %v1922
  %v1925 = vtanh.pop %v1924
  %1927 = vrot.lane.b32.xlu0 %v1925, 64
  %v1928 = vpop.permute.xlu0 %1927
  %v1930 = vmul.f32 %v1912, %v1928
  %v1931 = vld [vmem:[%s947] sm:$0xff]
  %1933 = vrot.lane.b32.xlu0 %v1930, 32
  %v1934 = vpop.permute.xlu0 %1933
  %v1935 = vsel %vm209, %v1934, 0
  %1937 = vmatprep.subr.mxu0 0.0
  %1938 = vmatpush1.msra.mxu0 %v1058
  %1939 = vmatprep.subr.mxu0 0.0
  %1940 = vmatpush1.msra.mxu0 %v1059
  %1941 = vmatprep.subr.mxu0 0.0
  %1942 = vmatpush1.msra.mxu0 %v1060
  %1943 = vmatprep.subr.mxu0 0.0
  %1944 = vmatpush1.msra.mxu0 %v1061
  %1945 = vmatprep.subr.mxu0 0.0
  %1946 = vmatpush1.msra.mxu0 0.0
  %1947 = vmatprep.subr.mxu0 0.0
  %1948 = vmatpush1.msra.mxu0 0.0
  %1949 = vmatprep.subr.mxu0 0.0
  %1950 = vmatpush1.msra.mxu0 0.0
  %1951 = vmatprep.subr.mxu0 0.0
  %1952 = vmatpush1.msra.mxu0 0.0
  %1953 = vmatprep.subr.mxu0 0.0
  %1954 = vmatpush1.msra.mxu0 0.0
  %1955 = vmatprep.subr.mxu0 0.0
  %1956 = vmatpush1.msra.mxu0 0.0
  %1957 = vmatprep.subr.mxu0 0.0
  %1958 = vmatpush1.msra.mxu0 0.0
  %1959 = vmatprep.subr.mxu0 0.0
  %1960 = vmatpush1.msra.mxu0 0.0
  %1961 = vmatprep.subr.mxu0 0.0
  %1962 = vmatpush1.msra.mxu0 0.0
  %1963 = vmatprep.subr.mxu0 0.0
  %1964 = vmatpush1.msra.mxu0 0.0
  %1965 = vmatprep.subr.mxu0 0.0
  %1966 = vmatpush1.msra.mxu0 0.0
  %1967 = vmatprep.subr.mxu0 0.0
  %1968 = vmatpush1.msra.mxu0 0.0
  %1969 = vmatprep.subr.mxu0 0.0
  %1970 = vmatpush1.msra.mxu0 0.0
  %1971 = vmatprep.subr.mxu0 0.0
  %1972 = vmatpush1.msra.mxu0 0.0
  %1973 = vmatprep.subr.mxu0 0.0
  %1974 = vmatpush1.msra.mxu0 0.0
  %1975 = vmatprep.subr.mxu0 0.0
  %1976 = vmatpush1.msra.mxu0 0.0
  %1977 = vmatprep.subr.mxu0 0.0
  %1978 = vmatpush1.msra.mxu0 0.0
  %1979 = vmatprep.subr.mxu0 0.0
  %1980 = vmatpush1.msra.mxu0 0.0
  %1981 = vmatprep.subr.mxu0 0.0
  %1982 = vmatpush1.msra.mxu0 0.0
  %1983 = vmatprep.subr.mxu0 0.0
  %1984 = vmatpush1.msra.mxu0 0.0
  %1985 = vmatprep.subr.mxu0 0.0
  %1986 = vmatpush1.msra.mxu0 0.0
  %1987 = vmatprep.subr.mxu0 0.0
  %1988 = vmatpush1.msra.mxu0 0.0
  %1989 = vmatprep.subr.mxu0 0.0
  %1990 = vmatpush1.msra.mxu0 0.0
  %1991 = vmatprep.subr.mxu0 0.0
  %1992 = vmatpush1.msra.mxu0 0.0
  %1993 = vmatprep.subr.mxu0 0.0
  %1994 = vmatpush1.msra.mxu0 0.0
  %1995 = vmatprep.subr.mxu0 0.0
  %1996 = vmatpush1.msra.mxu0 0.0
  %1997 = vmatprep.subr.mxu0 0.0
  %1998 = vmatpush1.msra.mxu0 0.0
  %1999 = vmatprep.subr.mxu0 0.0
  %2000 = vmatpush1.msra.mxu0 0.0
  %2001 = vmatprep.mubr.f32.mxu0 0.0
  %2002 = vmatmul.mubr.f32.gmra.mrb[0].mxu0 %v1935
  %v2003 = vpop.f32.mrb[0].mxu0
  %v2004 = vadd.f32 0.0, %v2003
  %v2005 = vpop.f32.mrb[0].mxu0
  %2006 = vdwg.mxu0
  %v2007 = vadd.f32 %v1931, %v2004
  %v2008 = vxor.u32 %v2007, 2147483648
  %v2009 = vmul.f32 %v2008, 1.442695
  %v2010 = vpow.pop %v2009
  %v2011 = vadd.f32 %v2010, 1.0
  %v2012 = vrcp.pop %v2011
  %v2013 = vmul.f32 1.0, %v2012
  %v2014 = vtanh.pop %v2007
  %v2015 = vmul.f32 %v2013, %v1924
  %2017 = vrot.lane.b32.xlu0 %v2014, 64
  %v2018 = vpop.permute.xlu0 %2017
  %v2020 = vmul.f32 %v2013, %v2018
  %2022 = vrot.lane.b32.xlu0 %v2020, 32
  %v2023 = vpop.permute.xlu0 %2022
  %v2025 = vadd.f32 %v2015, %v2023
  %v2026 = vtanh.pop %v2025
  %2028 = vrot.lane.b32.xlu0 %v2026, 64
  %v2029 = vpop.permute.xlu0 %2028
  %v2031 = vmul.f32 %v2013, %v2029
  %2033 = vrot.lane.b32.xlu0 %v2031, 32
  %v2034 = vpop.permute.xlu0 %2033
  %s2036 = scalar_lea.vmem %s14, 8
  %2037 = vst.msk [vmem:[%s2036] sm:$0xff] %vm209, %v2034
  %2039 = vrot.lane.b32.xlu0 %v2025, 96
  %v2040 = vpop.permute.xlu0 %2039
  %s2042 = scalar_lea.vmem %s15, 8
  %2043 = vst.msk [vmem:[%s2042] sm:$0xff] %vm209, %v2040
  %v2044 = vld [vmem:[%s9] sm:$0xff]
  %v2045 = vld [vmem:[%s9 + $0x8] sm:$0xff]
  %v2046 = vld [vmem:[%s9 + $0x10] sm:$0xff]
  %v2047 = vld [vmem:[%s9 + $0x18] sm:$0xff]
  %v2048 = vld [vmem:[%s10] sm:$0x1]
  %v2050 = vlaneseq
  %v2051 = vshrl.u32 %v2050, 7
  %v2052 = vsub.s32 0, %v2051
  %v2053 = vrot.slane %v2048, %v2052
  %v2055 = vsel %vm209, %v2034, 0
  %2057 = vmatprep.subr.mxu0 0.0
  %2058 = vmatpush1.msra.mxu0 %v2044
  %2059 = vmatprep.subr.mxu0 0.0
  %2060 = vmatpush1.msra.mxu0 %v2045
  %2061 = vmatprep.subr.mxu0 0.0
  %2062 = vmatpush1.msra.mxu0 %v2046
  %2063 = vmatprep.subr.mxu0 0.0
  %2064 = vmatpush1.msra.mxu0 %v2047
  %2065 = vmatprep.subr.mxu0 0.0
  %2066 = vmatpush1.msra.mxu0 0.0
  %2067 = vmatprep.subr.mxu0 0.0
  %2068 = vmatpush1.msra.mxu0 0.0
  %2069 = vmatprep.subr.mxu0 0.0
  %2070 = vmatpush1.msra.mxu0 0.0
  %2071 = vmatprep.subr.mxu0 0.0
  %2072 = vmatpush1.msra.mxu0 0.0
  %2073 = vmatprep.subr.mxu0 0.0
  %2074 = vmatpush1.msra.mxu0 0.0
  %2075 = vmatprep.subr.mxu0 0.0
  %2076 = vmatpush1.msra.mxu0 0.0
  %2077 = vmatprep.subr.mxu0 0.0
  %2078 = vmatpush1.msra.mxu0 0.0
  %2079 = vmatprep.subr.mxu0 0.0
  %2080 = vmatpush1.msra.mxu0 0.0
  %2081 = vmatprep.subr.mxu0 0.0
  %2082 = vmatpush1.msra.mxu0 0.0
  %2083 = vmatprep.subr.mxu0 0.0
  %2084 = vmatpush1.msra.mxu0 0.0
  %2085 = vmatprep.subr.mxu0 0.0
  %2086 = vmatpush1.msra.mxu0 0.0
  %2087 = vmatprep.subr.mxu0 0.0
  %2088 = vmatpush1.msra.mxu0 0.0
  %2089 = vmatprep.subr.mxu0 0.0
  %2090 = vmatpush1.msra.mxu0 0.0
  %2091 = vmatprep.subr.mxu0 0.0
  %2092 = vmatpush1.msra.mxu0 0.0
  %2093 = vmatprep.subr.mxu0 0.0
  %2094 = vmatpush1.msra.mxu0 0.0
  %2095 = vmatprep.subr.mxu0 0.0
  %2096 = vmatpush1.msra.mxu0 0.0
  %2097 = vmatprep.subr.mxu0 0.0
  %2098 = vmatpush1.msra.mxu0 0.0
  %2099 = vmatprep.subr.mxu0 0.0
  %2100 = vmatpush1.msra.mxu0 0.0
  %2101 = vmatprep.subr.mxu0 0.0
  %2102 = vmatpush1.msra.mxu0 0.0
  %2103 = vmatprep.subr.mxu0 0.0
  %2104 = vmatpush1.msra.mxu0 0.0
  %2105 = vmatprep.subr.mxu0 0.0
  %2106 = vmatpush1.msra.mxu0 0.0
  %2107 = vmatprep.subr.mxu0 0.0
  %2108 = vmatpush1.msra.mxu0 0.0
  %2109 = vmatprep.subr.mxu0 0.0
  %2110 = vmatpush1.msra.mxu0 0.0
  %2111 = vmatprep.subr.mxu0 0.0
  %2112 = vmatpush1.msra.mxu0 0.0
  %2113 = vmatprep.subr.mxu0 0.0
  %2114 = vmatpush1.msra.mxu0 0.0
  %2115 = vmatprep.subr.mxu0 0.0
  %2116 = vmatpush1.msra.mxu0 0.0
  %2117 = vmatprep.subr.mxu0 0.0
  %2118 = vmatpush1.msra.mxu0 0.0
  %2119 = vmatprep.subr.mxu0 0.0
  %2120 = vmatpush1.msra.mxu0 0.0
  %2121 = vmatprep.mubr.f32.mxu0 0.0
  %2122 = vmatmul.mubr.f32.gmra.mrb[0].mxu0 %v2055
  %v2123 = vpop.f32.mrb[0].mxu0
  %v2124 = vadd.f32 %v2053, %v2123
  %v2125 = vpop.f32.mrb[0].mxu0
  %2126 = vdwg.mxu0
  %v2127 = vmax.f32 %v2124, 0.0
  %v2128 = vld [vmem:[%s11] sm:$0xff]
  %v2129 = vld [vmem:[%s11 + $0x8] sm:$0xff]
  %v2130 = vld [vmem:[%s11 + $0x10] sm:$0xff]
  %v2131 = vld [vmem:[%s11 + $0x18] sm:$0xff]
  %v2132 = vld [vmem:[%s12] sm:$0x1]
  %v2134 = vlaneseq
  %v2135 = vshrl.u32 %v2134, 7
  %v2136 = vsub.s32 0, %v2135
  %v2137 = vrot.slane %v2132, %v2136
  %v2140 = vsel %vm209, %v2127, 0
  %2142 = vmatprep.subr.mxu0 0.0
  %2143 = vmatpush1.msra.mxu0 %v2128
  %2144 = vmatprep.subr.mxu0 0.0
  %2145 = vmatpush1.msra.mxu0 %v2129
  %2146 = vmatprep.subr.mxu0 0.0
  %2147 = vmatpush1.msra.mxu0 %v2130
  %2148 = vmatprep.subr.mxu0 0.0
  %2149 = vmatpush1.msra.mxu0 %v2131
  %2150 = vmatprep.subr.mxu0 0.0
  %2151 = vmatpush1.msra.mxu0 0.0
  %2152 = vmatprep.subr.mxu0 0.0
  %2153 = vmatpush1.msra.mxu0 0.0
  %2154 = vmatprep.subr.mxu0 0.0
  %2155 = vmatpush1.msra.mxu0 0.0
  %2156 = vmatprep.subr.mxu0 0.0
  %2157 = vmatpush1.msra.mxu0 0.0
  %2158 = vmatprep.subr.mxu0 0.0
  %2159 = vmatpush1.msra.mxu0 0.0
  %2160 = vmatprep.subr.mxu0 0.0
  %2161 = vmatpush1.msra.mxu0 0.0
  %2162 = vmatprep.subr.mxu0 0.0
  %2163 = vmatpush1.msra.mxu0 0.0
  %2164 = vmatprep.subr.mxu0 0.0
  %2165 = vmatpush1.msra.mxu0 0.0
  %2166 = vmatprep.subr.mxu0 0.0
  %2167 = vmatpush1.msra.mxu0 0.0
  %2168 = vmatprep.subr.mxu0 0.0
  %2169 = vmatpush1.msra.mxu0 0.0
  %2170 = vmatprep.subr.mxu0 0.0
  %2171 = vmatpush1.msra.mxu0 0.0
  %2172 = vmatprep.subr.mxu0 0.0
  %2173 = vmatpush1.msra.mxu0 0.0
  %2174 = vmatprep.subr.mxu0 0.0
  %2175 = vmatpush1.msra.mxu0 0.0
  %2176 = vmatprep.subr.mxu0 0.0
  %2177 = vmatpush1.msra.mxu0 0.0
  %2178 = vmatprep.subr.mxu0 0.0
  %2179 = vmatpush1.msra.mxu0 0.0
  %2180 = vmatprep.subr.mxu0 0.0
  %2181 = vmatpush1.msra.mxu0 0.0
  %2182 = vmatprep.subr.mxu0 0.0
  %2183 = vmatpush1.msra.mxu0 0.0
  %2184 = vmatprep.subr.mxu0 0.0
  %2185 = vmatpush1.msra.mxu0 0.0
  %2186 = vmatprep.subr.mxu0 0.0
  %2187 = vmatpush1.msra.mxu0 0.0
  %2188 = vmatprep.subr.mxu0 0.0
  %2189 = vmatpush1.msra.mxu0 0.0
  %2190 = vmatprep.subr.mxu0 0.0
  %2191 = vmatpush1.msra.mxu0 0.0
  %2192 = vmatprep.subr.mxu0 0.0
  %2193 = vmatpush1.msra.mxu0 0.0
  %2194 = vmatprep.subr.mxu0 0.0
  %2195 = vmatpush1.msra.mxu0 0.0
  %2196 = vmatprep.subr.mxu0 0.0
  %2197 = vmatpush1.msra.mxu0 0.0
  %2198 = vmatprep.subr.mxu0 0.0
  %2199 = vmatpush1.msra.mxu0 0.0
  %2200 = vmatprep.subr.mxu0 0.0
  %2201 = vmatpush1.msra.mxu0 0.0
  %2202 = vmatprep.subr.mxu0 0.0
  %2203 = vmatpush1.msra.mxu0 0.0
  %2204 = vmatprep.subr.mxu0 0.0
  %2205 = vmatpush1.msra.mxu0 0.0
  %2206 = vmatprep.mubr.f32.mxu0 0.0
  %2207 = vmatmul.mubr.f32.gmra.mrb[0].mxu0 %v2140
  %v2208 = vpop.f32.mrb[0].mxu0
  %v2209 = vadd.f32 %v2137, %v2208
  %v2210 = vpop.f32.mrb[0].mxu0
  %2211 = vdwg.mxu0
  %vm2212 = vcmask 64512
  %2213 = vst.msk [vmem:[%s13] sm:$0xff] %vm2212, %v2209
  // Predicated region
  $region54: #{lstmnet_forward.1} parent=0 // pred_check
    _
  $region55: #{lstmnet_forward.1} parent=0 // pred_check_branch
    %2215 = sbr.rel (0) target = $region57
  $region56: #{lstmnet_forward.1} parent=0 // pred_region
    _
  $region57: #{lstmnet_forward.1} parent=0 // pred_fallthru
    _
  // Predicated region
  $region58: #{lstmnet_forward.1} parent=0 // pred_check
    _
  $region59: #{lstmnet_forward.1} parent=0 // pred_check_branch
    %2217 = sbr.rel (0) target = $region61
  $region60: #{lstmnet_forward.1} parent=0 // pred_region
    _
  $region61: #{lstmnet_forward.1} parent=0 // pred_fallthru
    _
  // Predicated region
  $region62: #{lstmnet_forward.1} parent=0 // pred_check
    _
  $region63: #{lstmnet_forward.1} parent=0 // pred_check_branch
    %2219 = sbr.rel (0) target = $region65
  $region64: #{lstmnet_forward.1} parent=0 // pred_region
    _
  $region65: #{lstmnet_forward.1} parent=0 // pred_fallthru
    _
  // Predicated region
  $region66: #{lstmnet_forward.1} parent=0 // pred_check
    _
  $region67: #{lstmnet_forward.1} parent=0 // pred_check_branch
    %2221 = sbr.rel (0) target = $region69
  $region68: #{lstmnet_forward.1} parent=0 // pred_region
    _
  $region69: #{lstmnet_forward.1} parent=0 // pred_fallthru
    _
  // Predicated region
  $region70: #{lstmnet_forward.1} parent=0 // pred_check
    _
  $region71: #{lstmnet_forward.1} parent=0 // pred_check_branch
    %2223 = sbr.rel (0) target = $region73
  $region72: #{lstmnet_forward.1} parent=0 // pred_region
    _
  $region73: #{lstmnet_forward.1} parent=0 // pred_fallthru
    _
  // Predicated region
  $region74: #{lstmnet_forward.1} parent=0 // pred_check
    _
  $region75: #{lstmnet_forward.1} parent=0 // pred_check_branch
    %2225 = sbr.rel (0) target = $region77
  $region76: #{lstmnet_forward.1} parent=0 // pred_region
    _
  $region77: #{lstmnet_forward.1} parent=0 // pred_fallthru
    _

</llo_original>
